<compile_context>
chip_gen: v7x
topology: tpu7x:2x2x1
jax: 0.10.0
libtpu: 0.0.40
codegen_flags: <defaults>
</compile_context>

<pallas_src>
import functools
import math

import numpy as np
import jax
import jax.numpy as jnp
from jax.experimental import pallas as pl
from jax.experimental.pallas import tpu as pltpu

EMB = 64          # embedding_size
HEADS = 3         # n_heads
N_LAYERS = 4
TOP_K_EVERY_N = 2
TOP_K_RATIO = 0.5
DENSE = 256       # dense_neurons
BN_EPS = 1e-5

ROW_TILE = 512    # rows (nodes / edges) per grid step


# ----------------------------- tiling helpers ------------------------------------------

def _round_up(x, m):
    return (x + m - 1) // m * m


def _row_tiling(m):
    tm = min(ROW_TILE, _round_up(max(m, 1), 16))
    m_pad = _round_up(m, tm)
    return tm, m_pad


def _pad_rows(a, m_pad):
    m = a.shape[0]
    if m == m_pad:
        return a
    return jnp.pad(a, ((0, m_pad - m), (0, 0)))


def _compiler_params():
    return pltpu.CompilerParams(dimension_semantics=("parallel",))


# ----------------------------- Pallas kernels ------------------------------------------

def _linear_kernel(x_ref, w_ref, b_ref, o_ref, *, relu):
    y = jnp.dot(x_ref[...], w_ref[...], preferred_element_type=jnp.float32) + b_ref[...]
    if relu:
        y = jnp.maximum(y, 0.0)
    o_ref[...] = y


def _linear_relu_bn_kernel(x_ref, w_ref, b_ref, s_ref, t_ref, o_ref):
    # relu(x @ w + b) followed by eval-mode BN folded to an affine (scale, shift)
    y = jnp.dot(x_ref[...], w_ref[...], preferred_element_type=jnp.float32) + b_ref[...]
    y = jnp.maximum(y, 0.0)
    o_ref[...] = y * s_ref[...] + t_ref[...]


def pallas_linear(x, w, b=None, *, relu=False, bn=None):
    """y = x @ w + b (+ relu) (+ BN affine).  x:[M,K], w:[K,N].  bf16 MXU, f32 epilogue."""
    M, K = x.shape
    N = w.shape[1]
    if b is None:
        b = jnp.zeros((N,), jnp.float32)
    tm, m_pad = _row_tiling(M)
    grid = (m_pad // tm,)

    xp = _pad_rows(x.astype(jnp.bfloat16), m_pad)
    wb = w.astype(jnp.bfloat16)

    row_spec = pl.BlockSpec((tm, K), lambda i: (i, 0))
    full = lambda shape: pl.BlockSpec(shape, lambda i: (0, 0))

    args = [xp, wb, b.reshape(1, N).astype(jnp.float32)]
    in_specs = [row_spec, full((K, N)), full((1, N))]
    if bn is not None:
        scale, shift = bn
        kernel = _linear_relu_bn_kernel
        args += [scale.reshape(1, N).astype(jnp.float32),
                 shift.reshape(1, N).astype(jnp.float32)]
        in_specs += [full((1, N)), full((1, N))]
    else:
        kernel = functools.partial(_linear_kernel, relu=relu)

    out = pl.pallas_call(
        kernel,
        out_shape=jax.ShapeDtypeStruct((m_pad, N), jnp.float32),
        grid=grid,
        in_specs=in_specs,
        out_specs=pl.BlockSpec((tm, N), lambda i: (i, 0)),
        compiler_params=_compiler_params(),
    )(*args)
    return out[:M]


def _qkv_skip_kernel(x_ref, wqkv_ref, bqkv_ref, ws_ref, bs_ref, qkv_ref, skip_ref):
    # one pass over x: Q/K/V projection (bf16 out) + skip projection (f32 out).
    # two dots instead of one wide dot so no lane-misaligned (576|192) slicing is needed.
    x = x_ref[...]
    qkv = jnp.dot(x, wqkv_ref[...], preferred_element_type=jnp.float32) + bqkv_ref[...]
    qkv_ref[...] = qkv.astype(jnp.bfloat16)
    skip_ref[...] = jnp.dot(x, ws_ref[...], preferred_element_type=jnp.float32) + bs_ref[...]


def pallas_qkv_skip(x, p):
    """Returns (qkv bf16 [M, 3*H*C], x_r f32 [M, H*C])."""
    M, K = x.shape
    hc = HEADS * EMB
    tm, m_pad = _row_tiling(M)
    grid = (m_pad // tm,)
    xp = _pad_rows(x.astype(jnp.bfloat16), m_pad)
    row = pl.BlockSpec((tm, K), lambda i: (i, 0))
    full = lambda shape: pl.BlockSpec(shape, lambda i: (0, 0))
    qkv, skip = pl.pallas_call(
        _qkv_skip_kernel,
        out_shape=(jax.ShapeDtypeStruct((m_pad, 3 * hc), jnp.bfloat16),
                   jax.ShapeDtypeStruct((m_pad, hc), jnp.float32)),
        grid=grid,
        in_specs=[row, full((K, 3 * hc)), full((1, 3 * hc)),
                  full((K, hc)), full((1, hc))],
        out_specs=(pl.BlockSpec((tm, 3 * hc), lambda i: (i, 0)),
                   pl.BlockSpec((tm, hc), lambda i: (i, 0))),
        compiler_params=_compiler_params(),
    )(xp, p["Wqkv"], p["bqkv"].reshape(1, 3 * hc),
      p["Wskip"], p["bskip"].reshape(1, hc))
    return qkv[:M], skip[:M]


def _edge_attn_kernel(q_ref, k_ref, v_ref, ea_ref, we_ref, logit_ref, msg_ref):
    # lin_edge fused: e = edge_attr @ We (no bias), then logits + messages.
    e = jnp.dot(ea_ref[...], we_ref[...], preferred_element_type=jnp.float32)  # [te, H*C]
    q = q_ref[...].astype(jnp.float32)
    k = k_ref[...].astype(jnp.float32) + e            # key_j + edge embedding
    msg_ref[...] = v_ref[...].astype(jnp.float32) + e  # value_j + edge embedding
    scale = 1.0 / math.sqrt(EMB)
    qk = q * k
    cols = [jnp.sum(qk[:, h * EMB:(h + 1) * EMB], axis=-1, keepdims=True) * scale
            for h in range(HEADS)]
    logit_ref[...] = jnp.concatenate(cols, axis=-1)


def pallas_edge_attention(q_i, k_j, v_j, edge_attr, We):
    """Per-edge attention logits [E,H] + messages [E,H*C] (f32), lin_edge fused in."""
    E, W = q_i.shape
    D = edge_attr.shape[1]
    te, e_pad = _row_tiling(E)
    grid = (e_pad // te,)
    pad = lambda a: _pad_rows(a, e_pad)
    row = pl.BlockSpec((te, W), lambda i: (i, 0))
    erow = pl.BlockSpec((te, D), lambda i: (i, 0))
    logits, msg = pl.pallas_call(
        _edge_attn_kernel,
        out_shape=(jax.ShapeDtypeStruct((e_pad, HEADS), jnp.float32),
                   jax.ShapeDtypeStruct((e_pad, W), jnp.float32)),
        grid=grid,
        in_specs=[row, row, row, erow, pl.BlockSpec((D, W), lambda i: (0, 0))],
        out_specs=(pl.BlockSpec((te, HEADS), lambda i: (i, 0)), row),
        compiler_params=_compiler_params(),
    )(pad(q_i), pad(k_j), pad(v_j), pad(edge_attr), We)
    return logits[:E], msg[:E]


def _beta_gate_kernel(agg_ref, xr_ref, wa_ref, wx_ref, o_ref):
    # beta = sigmoid(agg @ (w_agg + w_diff) + x_r @ (w_skip - w_diff))  (VPU row reductions)
    agg = agg_ref[...]
    xr = xr_ref[...]
    z = (jnp.sum(agg * wa_ref[...], axis=-1, keepdims=True)
         + jnp.sum(xr * wx_ref[...], axis=-1, keepdims=True))
    beta = jax.nn.sigmoid(z)
    o_ref[...] = beta * xr + (1.0 - beta) * agg


def pallas_beta_gate(agg, x_r, w_agg, w_skip):
    M, C = agg.shape
    tm, m_pad = _row_tiling(M)
    grid = (m_pad // tm,)
    row = pl.BlockSpec((tm, C), lambda i: (i, 0))
    vec = pl.BlockSpec((1, C), lambda i: (0, 0))
    out = pl.pallas_call(
        _beta_gate_kernel,
        out_shape=jax.ShapeDtypeStruct((m_pad, C), jnp.float32),
        grid=grid,
        in_specs=[row, row, vec, vec],
        out_specs=row,
        compiler_params=_compiler_params(),
    )(_pad_rows(agg, m_pad), _pad_rows(x_r, m_pad),
      w_agg.reshape(1, C).astype(jnp.float32), w_skip.reshape(1, C).astype(jnp.float32))
    return out[:M]


# ----------------------------- graph glue (plain JAX, jit-able) -------------------------

def segment_softmax(logits, seg, num_segments):
    seg_max = jax.ops.segment_max(logits, seg, num_segments=num_segments)
    seg_max = jnp.where(jnp.isfinite(seg_max), seg_max, 0.0)
    ex = jnp.exp(logits - seg_max[seg])
    denom = jax.ops.segment_sum(ex, seg, num_segments=num_segments) + 1e-16
    return ex / denom[seg]


def transformer_conv(p, x, edge_attr_bf16, edge_index, edge_valid):
    """PyG TransformerConv(heads=HEADS, concat=True, beta=True, edge_dim) in eval mode.

    Dropped (pooled-away) nodes/edges are handled with validity masks (static shapes)."""
    N = x.shape[0]
    E = edge_attr_bf16.shape[0]
    H, C = HEADS, EMB
    hc = H * C
    src, dst = edge_index[0], edge_index[1]            # message flows src (j) -> dst (i)

    # one pass over x: Q/K/V (bf16) + skip (f32) projections
    qkv, x_r = pallas_qkv_skip(x, p)                   # [N, 3*H*C] bf16, [N, H*C] f32
    q = qkv[:, 0 * hc:1 * hc]
    k = qkv[:, 1 * hc:2 * hc]
    v = qkv[:, 2 * hc:3 * hc]

    # TODO(synk): fuse gather + attention + segment-softmax + scatter-add into a single
    # Pallas kernel using dst-sorted edges + PrefetchScalarGridSpec; for now the
    # data-dependent gather/segment ops stay in XLA.
    logits, msg = pallas_edge_attention(q[dst], k[src], v[src], edge_attr_bf16, p["We"])

    logits = jnp.where(edge_valid[:, None], logits, -1e30)      # mask pooled-away edges
    alpha = segment_softmax(logits, dst, N)                     # [E, H]
    alpha = jnp.where(edge_valid[:, None], alpha, 0.0)
    weighted = (msg.reshape(E, H, C) * alpha[:, :, None]).reshape(E, hc)
    agg = jax.ops.segment_sum(weighted, dst, num_segments=N)    # [N, H*C]

    # fused lin_beta + sigmoid + gate
    return pallas_beta_gate(agg, x_r, p["wbeta_agg"], p["wbeta_skip"])


def topk_pool_mask(weight, x, valid, batch, num_graphs, ratio=TOP_K_RATIO):
    """PyG TopKPooling (tanh nonlinearity, min_score=None), mask-based / static-shape."""
    N = x.shape[0]
    w_norm = jnp.sqrt(jnp.sum(weight * weight))
    raw = jnp.sum(x * weight[None, :], axis=-1)                 # VPU reduction, no matmul
    score = jnp.tanh(raw / w_norm)

    masked_score = jnp.where(valid, score, -jnp.inf)
    order = jnp.lexsort((-masked_score, batch))                 # batch asc, score desc
    sizes = jax.ops.segment_sum(jnp.ones((N,), jnp.int32), batch, num_segments=num_graphs)
    starts = jnp.concatenate([jnp.zeros((1,), jnp.int32), jnp.cumsum(sizes)[:-1]])
    rank_sorted = jnp.arange(N, dtype=jnp.int32) - starts[batch[order]]
    rank = jnp.zeros((N,), jnp.int32).at[order].set(rank_sorted)

    n_valid = jax.ops.segment_sum(valid.astype(jnp.float32), batch, num_segments=num_graphs)
    k = jnp.ceil(ratio * n_valid).astype(jnp.int32)
    keep = (rank < k[batch]) & valid

    x_new = jnp.where(keep[:, None], x * score[:, None], 0.0)
    return x_new, keep


def global_pools(x, batch, valid, num_graphs):
    seg = jnp.where(valid, batch, num_graphs)                   # invalid -> dummy segment
    maxp = jax.ops.segment_max(x, seg, num_segments=num_graphs + 1)[:num_graphs]   # gmp
    sump = jax.ops.segment_sum(x, seg, num_segments=num_graphs + 1)[:num_graphs]
    cnt = jax.ops.segment_sum(valid.astype(jnp.float32), batch, num_segments=num_graphs)
    meanp = sump / jnp.maximum(cnt, 1.0)[:, None]                                  # gap
    return jnp.concatenate([maxp, meanp], axis=1)               # [G, 2*EMB]


# ----------------------------- full forward (jit-able) ----------------------------------

@functools.partial(jax.jit, static_argnames=("num_graphs",))
def gnn_forward(params, x, edge_attr, edge_index, batch_index, *, num_graphs):
    N = x.shape[0]
    E = edge_index.shape[1]
    node_valid = jnp.ones((N,), jnp.bool_)
    edge_valid = jnp.ones((E,), jnp.bool_)
    edge_attr_bf16 = edge_attr.astype(jnp.bfloat16)   # cast once, reused by every layer

    x = transformer_conv(params["conv1"], x, edge_attr_bf16, edge_index, edge_valid)
    t = params["transf1"]
    x = pallas_linear(x, t["W"], t["b"], bn=(t["bn_scale"], t["bn_shift"]))  # relu+BN fused

    global_representation = []
    pool_i = 0
    for idx in range(N_LAYERS):
        x = transformer_conv(params["conv_layers"][idx], x, edge_attr_bf16,
                             edge_index, edge_valid)
        t = params["transf_layers"][idx]
        x = pallas_linear(x, t["W"], t["b"], bn=(t["bn_scale"], t["bn_shift"]))
        if idx % TOP_K_EVERY_N == 0:
            x, node_valid = topk_pool_mask(params["pool_layers"][pool_i], x,
                                           node_valid, batch_index, num_graphs)
            edge_valid = edge_valid & node_valid[edge_index[0]] & node_valid[edge_index[1]]
            pool_i += 1
            global_representation.append(global_pools(x, batch_index, node_valid, num_graphs))

    x = sum(global_representation)                                           # [G, 2*EMB]
    x = pallas_linear(x, params["linear1"]["W"], params["linear1"]["b"], relu=True)
    # F.dropout(p=0.8) -> identity in eval mode
    x = pallas_linear(x, params["linear2"]["W"], params["linear2"]["b"], relu=True)
    x = pallas_linear(x, params["linear3"]["W"], params["linear3"]["b"])
    return x                                                                 # [G, 1]


# ----------------------------- parameters ------------------------------------------------

class KeyGen:
    def __init__(self, key):
        self.key = key

    def __call__(self):
        self.key, sub = jax.random.split(self.key)
        return sub


def glorot(kg, fan_in, fan_out):
    lim = math.sqrt(6.0 / (fan_in + fan_out))
    return jax.random.uniform(kg(), (fan_in, fan_out), jnp.float32, -lim, lim)


def bias_init(kg, fan_in, fan_out):
    lim = 1.0 / math.sqrt(fan_in)
    return jax.random.uniform(kg(), (fan_out,), jnp.float32, -lim, lim)


def linear_params(kg, fan_in, fan_out):
    return {"W": glorot(kg, fan_in, fan_out), "b": bias_init(kg, fan_in, fan_out)}


def conv_params(kg, in_ch, edge_dim):
    hc = HEADS * EMB
    return {
        "Wq": glorot(kg, in_ch, hc), "bq": bias_init(kg, in_ch, hc),
        "Wk": glorot(kg, in_ch, hc), "bk": bias_init(kg, in_ch, hc),
        "Wv": glorot(kg, in_ch, hc), "bv": bias_init(kg, in_ch, hc),
        "We": glorot(kg, edge_dim, hc),                    # lin_edge, bias=False
        "Ws": glorot(kg, in_ch, hc), "bs": bias_init(kg, in_ch, hc),   # lin_skip
        "Wbeta": glorot(kg, 3 * hc, 1),                    # lin_beta, bias=False
    }


def bn_params():
    return (jnp.ones((EMB,), jnp.float32), jnp.zeros((EMB,), jnp.float32),
            jnp.zeros((EMB,), jnp.float32), jnp.ones((EMB,), jnp.float32))


def init_params(kg, feature_size, edge_dim):
    params = {
        "conv1": conv_params(kg, feature_size, edge_dim),
        "transf1": linear_params(kg, HEADS * EMB, EMB),
        "bn1": bn_params(),
        "conv_layers": [], "transf_layers": [], "bn_layers": [], "pool_layers": [],
        "linear1": linear_params(kg, EMB * 2, DENSE),
        "linear2": linear_params(kg, DENSE, DENSE // 2),
        "linear3": linear_params(kg, DENSE // 2, 1),
    }
    lim = 1.0 / math.sqrt(EMB)
    for idx in range(N_LAYERS):
        params["conv_layers"].append(conv_params(kg, EMB, edge_dim))
        params["transf_layers"].append(linear_params(kg, HEADS * EMB, EMB))
        params["bn_layers"].append(bn_params())
        if idx % TOP_K_EVERY_N == 0:
            params["pool_layers"].append(
                jax.random.uniform(kg(), (EMB,), jnp.float32, -lim, lim))
    return params


def _prepare_conv(p):
    hc = HEADS * EMB
    wb = p["Wbeta"][:, 0]
    return {
        # fused Q/K/V projection (bf16) + separate skip projection (bf16 weights, f32 out)
        "Wqkv": jnp.concatenate([p["Wq"], p["Wk"], p["Wv"]], axis=1).astype(jnp.bfloat16),
        "bqkv": jnp.concatenate([p["bq"], p["bk"], p["bv"]], axis=0),
        "Wskip": p["Ws"].astype(jnp.bfloat16),
        "bskip": p["bs"],
        "We": p["We"].astype(jnp.bfloat16),
        # lin_beta split: [agg, skip, agg-skip] @ Wbeta == agg@(w0+w2) + skip@(w1-w2)
        "wbeta_agg": wb[:hc] + wb[2 * hc:],
        "wbeta_skip": wb[hc:2 * hc] - wb[2 * hc:],
    }


def _prepare_transf(lin, bn):
    gamma, beta, mean, var = bn
    scale = gamma * jax.lax.rsqrt(var + BN_EPS)
    shift = beta - mean * scale
    return {"W": lin["W"].astype(jnp.bfloat16), "b": lin["b"],
            "bn_scale": scale, "bn_shift": shift}


def prepare_params(raw):
    return {
        "conv1": _prepare_conv(raw["conv1"]),
        "transf1": _prepare_transf(raw["transf1"], raw["bn1"]),
        "conv_layers": [_prepare_conv(c) for c in raw["conv_layers"]],
        "transf_layers": [_prepare_transf(t, b)
                          for t, b in zip(raw["transf_layers"], raw["bn_layers"])],
        "pool_layers": raw["pool_layers"],
        "linear1": raw["linear1"], "linear2": raw["linear2"], "linear3": raw["linear3"],
    }


# ----------------------------- main ------------------------------------------------------

if __name__ == "__main__":
    feature_size, edge_dim = 8, 4
    nodes_per_graph = [6, 6]
    num_graphs = len(nodes_per_graph)
    N = sum(nodes_per_graph)

    kg = KeyGen(jax.random.PRNGKey(0))
    x = jax.random.normal(kg(), (N, feature_size), jnp.float32)
    batch_index = jnp.asarray(
        np.repeat(np.arange(num_graphs), nodes_per_graph).astype(np.int32))

    # edges: self loops + bidirectional ring inside each graph
    src_list, dst_list = [], []
    off = 0
    for n in nodes_per_graph:
        for i in range(n):
            src_list += [off + i, off + i, off + (i + 1) % n]
            dst_list += [off + i, off + (i + 1) % n, off + i]
        off += n
    edge_index = jnp.asarray(np.stack([src_list, dst_list]).astype(np.int32))
    E = edge_index.shape[1]
    edge_attr = jax.random.normal(kg(), (E, edge_dim), jnp.float32)

    params = prepare_params(init_params(kg, feature_size, edge_dim))

    out = gnn_forward(params, x, edge_attr, edge_index, batch_index,
                      num_graphs=num_graphs)
    out = jax.block_until_ready(out)
    assert out.shape == (num_graphs, 1)
    assert bool(jnp.all(jnp.isfinite(out)))
    print("KERNEL_OK")
</pallas_src>

<mosaic_0001>
module attributes {stable_mosaic.version = 11 : i64} {
  func.func @_qkv_skip_kernel(%arg0: i32, %arg1: memref<16x8xbf16, #tpu.memory_space<vmem>>, %arg2: memref<8x576xbf16, #tpu.memory_space<vmem>>, %arg3: memref<1x576xf32, #tpu.memory_space<vmem>>, %arg4: memref<8x192xbf16, #tpu.memory_space<vmem>>, %arg5: memref<1x192xf32, #tpu.memory_space<vmem>>, %arg6: memref<16x576xbf16, #tpu.memory_space<vmem>>, %arg7: memref<16x192xf32, #tpu.memory_space<vmem>>) attributes {dimension_semantics = [#tpu.dimension_semantics<parallel>], iteration_bounds = array<i64: 1>, scalar_prefetch = 0 : i64, scratch_operands = 0 : i64, tpu.core_type = #tpu.core_type<tc>, window_params = [{transform_indices = @transform_0, window_bounds = array<i64: 16, 8>}, {pipeline_mode = #tpu.pipeline_mode<synchronous>, transform_indices = @transform_1, window_bounds = array<i64: 8, 576>}, {pipeline_mode = #tpu.pipeline_mode<synchronous>, transform_indices = @transform_2, window_bounds = array<i64: 1, 576>}, {pipeline_mode = #tpu.pipeline_mode<synchronous>, transform_indices = @transform_3, window_bounds = array<i64: 8, 192>}, {pipeline_mode = #tpu.pipeline_mode<synchronous>, transform_indices = @transform_4, window_bounds = array<i64: 1, 192>}, {transform_indices = @transform_5, window_bounds = array<i64: 16, 576>}, {transform_indices = @transform_6, window_bounds = array<i64: 16, 192>}]} {
    %c0 = arith.constant 0 : index
    %c0_0 = arith.constant 0 : index
    %0 = vector.load %arg1[%c0, %c0_0] : memref<16x8xbf16, #tpu.memory_space<vmem>>, vector<16x8xbf16>
    %c0_1 = arith.constant 0 : index
    %c0_2 = arith.constant 0 : index
    %1 = vector.load %arg2[%c0_1, %c0_2] : memref<8x576xbf16, #tpu.memory_space<vmem>>, vector<8x576xbf16>
    %cst = arith.constant dense<0.000000e+00> : vector<16x576xf32>
    %2 = tpu.matmul %0, %1, %cst {dimension_numbers = #tpu.dot_dimension_numbers<[1], [0], [0], [1], [0, 0, 1, 1], [], []>} : vector<16x8xbf16>, vector<8x576xbf16>, vector<16x576xf32> -> vector<16x576xf32>
    %c0_3 = arith.constant 0 : index
    %c0_4 = arith.constant 0 : index
    %3 = vector.load %arg3[%c0_3, %c0_4] : memref<1x576xf32, #tpu.memory_space<vmem>>, vector<1x576xf32>
    %4 = vector.broadcast %3 : vector<1x576xf32> to vector<16x576xf32>
    %5 = arith.addf %2, %4 : vector<16x576xf32>
    %6 = arith.truncf %5 : vector<16x576xf32> to vector<16x576xbf16>
    %c0_5 = arith.constant 0 : index
    %c0_6 = arith.constant 0 : index
    %7 = vector.load %arg6[%c0_5, %c0_6] : memref<16x576xbf16, #tpu.memory_space<vmem>>, vector<16x576xbf16>
    tpu.vector_store %arg6[%c0_5, %c0_6], %6 {strides = array<i32>} : memref<16x576xbf16, #tpu.memory_space<vmem>>, vector<16x576xbf16>,
    %c0_7 = arith.constant 0 : index
    %c0_8 = arith.constant 0 : index
    %8 = vector.load %arg4[%c0_7, %c0_8] : memref<8x192xbf16, #tpu.memory_space<vmem>>, vector<8x192xbf16>
    %cst_9 = arith.constant dense<0.000000e+00> : vector<16x192xf32>
    %9 = tpu.matmul %0, %8, %cst_9 {dimension_numbers = #tpu.dot_dimension_numbers<[1], [0], [0], [1], [0, 0, 1, 1], [], []>} : vector<16x8xbf16>, vector<8x192xbf16>, vector<16x192xf32> -> vector<16x192xf32>
    %c0_10 = arith.constant 0 : index
    %c0_11 = arith.constant 0 : index
    %10 = vector.load %arg5[%c0_10, %c0_11] : memref<1x192xf32, #tpu.memory_space<vmem>>, vector<1x192xf32>
    %11 = vector.broadcast %10 : vector<1x192xf32> to vector<16x192xf32>
    %12 = arith.addf %9, %11 : vector<16x192xf32>
    %c0_12 = arith.constant 0 : index
    %c0_13 = arith.constant 0 : index
    %13 = vector.load %arg7[%c0_12, %c0_13] : memref<16x192xf32, #tpu.memory_space<vmem>>, vector<16x192xf32>
    tpu.vector_store %arg7[%c0_12, %c0_13], %12 {strides = array<i32>} : memref<16x192xf32, #tpu.memory_space<vmem>>, vector<16x192xf32>,
    return
  }
  func.func @transform_0(%arg0: i32) -> (i32, i32) {
    %c0_i32 = arith.constant 0 : i32
    %c0_i32_0 = arith.constant 0 : i32
    return %arg0, %c0_i32 : i32, i32
  }
  func.func @transform_1(%arg0: i32) -> (i32, i32) {
    %c0_i32 = arith.constant 0 : i32
    %c0_i32_0 = arith.constant 0 : i32
    %c0_i32_1 = arith.constant 0 : i32
    return %c0_i32, %c0_i32_0 : i32, i32
  }
  func.func @transform_2(%arg0: i32) -> (i32, i32) {
    %c0_i32 = arith.constant 0 : i32
    %c0_i32_0 = arith.constant 0 : i32
    %c0_i32_1 = arith.constant 0 : i32
    return %c0_i32, %c0_i32_0 : i32, i32
  }
  func.func @transform_3(%arg0: i32) -> (i32, i32) {
    %c0_i32 = arith.constant 0 : i32
    %c0_i32_0 = arith.constant 0 : i32
    %c0_i32_1 = arith.constant 0 : i32
    return %c0_i32, %c0_i32_0 : i32, i32
  }
  func.func @transform_4(%arg0: i32) -> (i32, i32) {
    %c0_i32 = arith.constant 0 : i32
    %c0_i32_0 = arith.constant 0 : i32
    %c0_i32_1 = arith.constant 0 : i32
    return %c0_i32, %c0_i32_0 : i32, i32
  }
  func.func @transform_5(%arg0: i32) -> (i32, i32) {
    %c0_i32 = arith.constant 0 : i32
    %c0_i32_0 = arith.constant 0 : i32
    return %arg0, %c0_i32 : i32, i32
  }
  func.func @transform_6(%arg0: i32) -> (i32, i32) {
    %c0_i32 = arith.constant 0 : i32
    %c0_i32_0 = arith.constant 0 : i32
    return %arg0, %c0_i32 : i32, i32
  }
}

module attributes {stable_mosaic.version = 11 : i64} {
  func.func @_edge_attn_kernel(%arg0: i32, %arg1: memref<48x192xbf16, #tpu.memory_space<vmem>>, %arg2: memref<48x192xbf16, #tpu.memory_space<vmem>>, %arg3: memref<48x192xbf16, #tpu.memory_space<vmem>>, %arg4: memref<48x4xbf16, #tpu.memory_space<vmem>>, %arg5: memref<4x192xbf16, #tpu.memory_space<vmem>>, %arg6: memref<48x3xf32, #tpu.memory_space<vmem>>, %arg7: memref<48x192xf32, #tpu.memory_space<vmem>>) attributes {dimension_semantics = [#tpu.dimension_semantics<parallel>], iteration_bounds = array<i64: 1>, scalar_prefetch = 0 : i64, scratch_operands = 0 : i64, tpu.core_type = #tpu.core_type<tc>, window_params = [{transform_indices = @transform_0, window_bounds = array<i64: 48, 192>}, {transform_indices = @transform_1, window_bounds = array<i64: 48, 192>}, {transform_indices = @transform_2, window_bounds = array<i64: 48, 192>}, {transform_indices = @transform_3, window_bounds = array<i64: 48, 4>}, {pipeline_mode = #tpu.pipeline_mode<synchronous>, transform_indices = @transform_4, window_bounds = array<i64: 4, 192>}, {transform_indices = @transform_5, window_bounds = array<i64: 48, 3>}, {transform_indices = @transform_6, window_bounds = array<i64: 48, 192>}]} {
    %c0 = arith.constant 0 : index
    %c0_0 = arith.constant 0 : index
    %0 = vector.load %arg4[%c0, %c0_0] : memref<48x4xbf16, #tpu.memory_space<vmem>>, vector<48x4xbf16>
    %c0_1 = arith.constant 0 : index
    %c0_2 = arith.constant 0 : index
    %1 = vector.load %arg5[%c0_1, %c0_2] : memref<4x192xbf16, #tpu.memory_space<vmem>>, vector<4x192xbf16>
    %cst = arith.constant dense<0.000000e+00> : vector<48x192xf32>
    %2 = tpu.matmul %0, %1, %cst {dimension_numbers = #tpu.dot_dimension_numbers<[1], [0], [0], [1], [0, 0, 1, 1], [], []>} : vector<48x4xbf16>, vector<4x192xbf16>, vector<48x192xf32> -> vector<48x192xf32>
    %c0_3 = arith.constant 0 : index
    %c0_4 = arith.constant 0 : index
    %3 = vector.load %arg1[%c0_3, %c0_4] : memref<48x192xbf16, #tpu.memory_space<vmem>>, vector<48x192xbf16>
    %4 = arith.extf %3 : vector<48x192xbf16> to vector<48x192xf32>
    %c0_5 = arith.constant 0 : index
    %c0_6 = arith.constant 0 : index
    %5 = vector.load %arg2[%c0_5, %c0_6] : memref<48x192xbf16, #tpu.memory_space<vmem>>, vector<48x192xbf16>
    %6 = arith.extf %5 : vector<48x192xbf16> to vector<48x192xf32>
    %7 = arith.addf %6, %2 : vector<48x192xf32>
    %c0_7 = arith.constant 0 : index
    %c0_8 = arith.constant 0 : index
    %8 = vector.load %arg3[%c0_7, %c0_8] : memref<48x192xbf16, #tpu.memory_space<vmem>>, vector<48x192xbf16>
    %9 = arith.extf %8 : vector<48x192xbf16> to vector<48x192xf32>
    %10 = arith.addf %9, %2 : vector<48x192xf32>
    %c0_9 = arith.constant 0 : index
    %c0_10 = arith.constant 0 : index
    %11 = vector.load %arg7[%c0_9, %c0_10] : memref<48x192xf32, #tpu.memory_space<vmem>>, vector<48x192xf32>
    tpu.vector_store %arg7[%c0_9, %c0_10], %10 {strides = array<i32>} : memref<48x192xf32, #tpu.memory_space<vmem>>, vector<48x192xf32>,
    %12 = arith.mulf %4, %7 : vector<48x192xf32>
    %13 = vector.extract_strided_slice %12 {offsets = [0, 0], sizes = [48, 64], strides = [1, 1]} : vector<48x192xf32> to vector<48x64xf32>
    %cst_11 = arith.constant dense<0.000000e+00> : vector<48xf32>
    %14 = vector.multi_reduction <add>, %13, %cst_11 [1] : vector<48x64xf32> to vector<48xf32>
    %15 = vector.shape_cast %14 : vector<48xf32> to vector<48x1xf32>
    %cst_12 = arith.constant 1.250000e-01 : f32
    %16 = vector.broadcast %cst_12 : f32 to vector<48x1xf32>
    %17 = arith.mulf %15, %16 : vector<48x1xf32>
    %18 = vector.extract_strided_slice %12 {offsets = [0, 64], sizes = [48, 64], strides = [1, 1]} : vector<48x192xf32> to vector<48x64xf32>
    %cst_13 = arith.constant dense<0.000000e+00> : vector<48xf32>
    %19 = vector.multi_reduction <add>, %18, %cst_13 [1] : vector<48x64xf32> to vector<48xf32>
    %20 = vector.shape_cast %19 : vector<48xf32> to vector<48x1xf32>
    %cst_14 = arith.constant 1.250000e-01 : f32
    %21 = vector.broadcast %cst_14 : f32 to vector<48x1xf32>
    %22 = arith.mulf %20, %21 : vector<48x1xf32>
    %23 = vector.extract_strided_slice %12 {offsets = [0, 128], sizes = [48, 64], strides = [1, 1]} : vector<48x192xf32> to vector<48x64xf32>
    %cst_15 = arith.constant dense<0.000000e+00> : vector<48xf32>
    %24 = vector.multi_reduction <add>, %23, %cst_15 [1] : vector<48x64xf32> to vector<48xf32>
    %25 = vector.shape_cast %24 : vector<48xf32> to vector<48x1xf32>
    %cst_16 = arith.constant 1.250000e-01 : f32
    %26 = vector.broadcast %cst_16 : f32 to vector<48x1xf32>
    %27 = arith.mulf %25, %26 : vector<48x1xf32>
    %28 = tpu.concatenate %17, %22, %27 in 1 : vector<48x1xf32>, vector<48x1xf32>, vector<48x1xf32> -> vector<48x3xf32>
    %c0_17 = arith.constant 0 : index
    %c0_18 = arith.constant 0 : index
    %29 = vector.load %arg6[%c0_17, %c0_18] : memref<48x3xf32, #tpu.memory_space<vmem>>, vector<48x3xf32>
    tpu.vector_store %arg6[%c0_17, %c0_18], %28 {strides = array<i32>} : memref<48x3xf32, #tpu.memory_space<vmem>>, vector<48x3xf32>,
    return
  }
  func.func @transform_0(%arg0: i32) -> (i32, i32) {
    %c0_i32 = arith.constant 0 : i32
    %c0_i32_0 = arith.constant 0 : i32
    return %arg0, %c0_i32 : i32, i32
  }
  func.func @transform_1(%arg0: i32) -> (i32, i32) {
    %c0_i32 = arith.constant 0 : i32
    %c0_i32_0 = arith.constant 0 : i32
    return %arg0, %c0_i32 : i32, i32
  }
  func.func @transform_2(%arg0: i32) -> (i32, i32) {
    %c0_i32 = arith.constant 0 : i32
    %c0_i32_0 = arith.constant 0 : i32
    return %arg0, %c0_i32 : i32, i32
  }
  func.func @transform_3(%arg0: i32) -> (i32, i32) {
    %c0_i32 = arith.constant 0 : i32
    %c0_i32_0 = arith.constant 0 : i32
    return %arg0, %c0_i32 : i32, i32
  }
  func.func @transform_4(%arg0: i32) -> (i32, i32) {
    %c0_i32 = arith.constant 0 : i32
    %c0_i32_0 = arith.constant 0 : i32
    %c0_i32_1 = arith.constant 0 : i32
    return %c0_i32, %c0_i32_0 : i32, i32
  }
  func.func @transform_5(%arg0: i32) -> (i32, i32) {
    %c0_i32 = arith.constant 0 : i32
    %c0_i32_0 = arith.constant 0 : i32
    return %arg0, %c0_i32 : i32, i32
  }
  func.func @transform_6(%arg0: i32) -> (i32, i32) {
    %c0_i32 = arith.constant 0 : i32
    %c0_i32_0 = arith.constant 0 : i32
    return %arg0, %c0_i32 : i32, i32
  }
}

module attributes {stable_mosaic.version = 11 : i64} {
  func.func @_beta_gate_kernel(%arg0: i32, %arg1: memref<16x192xf32, #tpu.memory_space<vmem>>, %arg2: memref<16x192xf32, #tpu.memory_space<vmem>>, %arg3: memref<1x192xf32, #tpu.memory_space<vmem>>, %arg4: memref<1x192xf32, #tpu.memory_space<vmem>>, %arg5: memref<16x192xf32, #tpu.memory_space<vmem>>) attributes {dimension_semantics = [#tpu.dimension_semantics<parallel>], iteration_bounds = array<i64: 1>, scalar_prefetch = 0 : i64, scratch_operands = 0 : i64, tpu.core_type = #tpu.core_type<tc>, window_params = [{transform_indices = @transform_0, window_bounds = array<i64: 16, 192>}, {transform_indices = @transform_1, window_bounds = array<i64: 16, 192>}, {pipeline_mode = #tpu.pipeline_mode<synchronous>, transform_indices = @transform_2, window_bounds = array<i64: 1, 192>}, {pipeline_mode = #tpu.pipeline_mode<synchronous>, transform_indices = @transform_3, window_bounds = array<i64: 1, 192>}, {transform_indices = @transform_4, window_bounds = array<i64: 16, 192>}]} {
    %c0 = arith.constant 0 : index
    %c0_0 = arith.constant 0 : index
    %0 = vector.load %arg1[%c0, %c0_0] : memref<16x192xf32, #tpu.memory_space<vmem>>, vector<16x192xf32>
    %c0_1 = arith.constant 0 : index
    %c0_2 = arith.constant 0 : index
    %1 = vector.load %arg2[%c0_1, %c0_2] : memref<16x192xf32, #tpu.memory_space<vmem>>, vector<16x192xf32>
    %c0_3 = arith.constant 0 : index
    %c0_4 = arith.constant 0 : index
    %2 = vector.load %arg3[%c0_3, %c0_4] : memref<1x192xf32, #tpu.memory_space<vmem>>, vector<1x192xf32>
    %3 = vector.broadcast %2 : vector<1x192xf32> to vector<16x192xf32>
    %4 = arith.mulf %0, %3 : vector<16x192xf32>
    %cst = arith.constant dense<0.000000e+00> : vector<16xf32>
    %5 = vector.multi_reduction <add>, %4, %cst [1] : vector<16x192xf32> to vector<16xf32>
    %6 = vector.shape_cast %5 : vector<16xf32> to vector<16x1xf32>
    %c0_5 = arith.constant 0 : index
    %c0_6 = arith.constant 0 : index
    %7 = vector.load %arg4[%c0_5, %c0_6] : memref<1x192xf32, #tpu.memory_space<vmem>>, vector<1x192xf32>
    %8 = vector.broadcast %7 : vector<1x192xf32> to vector<16x192xf32>
    %9 = arith.mulf %1, %8 : vector<16x192xf32>
    %cst_7 = arith.constant dense<0.000000e+00> : vector<16xf32>
    %10 = vector.multi_reduction <add>, %9, %cst_7 [1] : vector<16x192xf32> to vector<16xf32>
    %11 = vector.shape_cast %10 : vector<16xf32> to vector<16x1xf32>
    %12 = arith.addf %6, %11 : vector<16x1xf32>
    %13 = arith.negf %12 : vector<16x1xf32>
    %14 = math.exp %13 : vector<16x1xf32>
    %cst_8 = arith.constant 1.000000e+00 : f32
    %15 = vector.broadcast %cst_8 : f32 to vector<16x1xf32>
    %16 = arith.addf %15, %14 : vector<16x1xf32>
    %17 = arith.divf %15, %16 : vector<16x1xf32>
    %18 = vector.broadcast %17 : vector<16x1xf32> to vector<16x192xf32>
    %19 = arith.mulf %18, %1 : vector<16x192xf32>
    %cst_9 = arith.constant 1.000000e+00 : f32
    %20 = vector.broadcast %cst_9 : f32 to vector<16x1xf32>
    %21 = arith.subf %20, %17 : vector<16x1xf32>
    %22 = vector.broadcast %21 : vector<16x1xf32> to vector<16x192xf32>
    %23 = arith.mulf %22, %0 : vector<16x192xf32>
    %24 = arith.addf %19, %23 : vector<16x192xf32>
    %c0_10 = arith.constant 0 : index
    %c0_11 = arith.constant 0 : index
    %25 = vector.load %arg5[%c0_10, %c0_11] : memref<16x192xf32, #tpu.memory_space<vmem>>, vector<16x192xf32>
    tpu.vector_store %arg5[%c0_10, %c0_11], %24 {strides = array<i32>} : memref<16x192xf32, #tpu.memory_space<vmem>>, vector<16x192xf32>,
    return
  }
  func.func @transform_0(%arg0: i32) -> (i32, i32) {
    %c0_i32 = arith.constant 0 : i32
    %c0_i32_0 = arith.constant 0 : i32
    return %arg0, %c0_i32 : i32, i32
  }
  func.func @transform_1(%arg0: i32) -> (i32, i32) {
    %c0_i32 = arith.constant 0 : i32
    %c0_i32_0 = arith.constant 0 : i32
    return %arg0, %c0_i32 : i32, i32
  }
  func.func @transform_2(%arg0: i32) -> (i32, i32) {
    %c0_i32 = arith.constant 0 : i32
    %c0_i32_0 = arith.constant 0 : i32
    %c0_i32_1 = arith.constant 0 : i32
    return %c0_i32, %c0_i32_0 : i32, i32
  }
  func.func @transform_3(%arg0: i32) -> (i32, i32) {
    %c0_i32 = arith.constant 0 : i32
    %c0_i32_0 = arith.constant 0 : i32
    %c0_i32_1 = arith.constant 0 : i32
    return %c0_i32, %c0_i32_0 : i32, i32
  }
  func.func @transform_4(%arg0: i32) -> (i32, i32) {
    %c0_i32 = arith.constant 0 : i32
    %c0_i32_0 = arith.constant 0 : i32
    return %arg0, %c0_i32 : i32, i32
  }
}

module attributes {stable_mosaic.version = 11 : i64} {
  func.func @_linear_relu_bn_kernel(%arg0: i32, %arg1: memref<16x192xbf16, #tpu.memory_space<vmem>>, %arg2: memref<192x64xbf16, #tpu.memory_space<vmem>>, %arg3: memref<1x64xf32, #tpu.memory_space<vmem>>, %arg4: memref<1x64xf32, #tpu.memory_space<vmem>>, %arg5: memref<1x64xf32, #tpu.memory_space<vmem>>, %arg6: memref<16x64xf32, #tpu.memory_space<vmem>>) attributes {dimension_semantics = [#tpu.dimension_semantics<parallel>], iteration_bounds = array<i64: 1>, scalar_prefetch = 0 : i64, scratch_operands = 0 : i64, tpu.core_type = #tpu.core_type<tc>, window_params = [{transform_indices = @transform_0, window_bounds = array<i64: 16, 192>}, {pipeline_mode = #tpu.pipeline_mode<synchronous>, transform_indices = @transform_1, window_bounds = array<i64: 192, 64>}, {pipeline_mode = #tpu.pipeline_mode<synchronous>, transform_indices = @transform_2, window_bounds = array<i64: 1, 64>}, {pipeline_mode = #tpu.pipeline_mode<synchronous>, transform_indices = @transform_3, window_bounds = array<i64: 1, 64>}, {pipeline_mode = #tpu.pipeline_mode<synchronous>, transform_indices = @transform_4, window_bounds = array<i64: 1, 64>}, {transform_indices = @transform_5, window_bounds = array<i64: 16, 64>}]} {
    %c0 = arith.constant 0 : index
    %c0_0 = arith.constant 0 : index
    %0 = vector.load %arg1[%c0, %c0_0] : memref<16x192xbf16, #tpu.memory_space<vmem>>, vector<16x192xbf16>
    %c0_1 = arith.constant 0 : index
    %c0_2 = arith.constant 0 : index
    %1 = vector.load %arg2[%c0_1, %c0_2] : memref<192x64xbf16, #tpu.memory_space<vmem>>, vector<192x64xbf16>
    %cst = arith.constant dense<0.000000e+00> : vector<16x64xf32>
    %2 = tpu.matmul %0, %1, %cst {dimension_numbers = #tpu.dot_dimension_numbers<[1], [0], [0], [1], [0, 0, 1, 1], [], []>} : vector<16x192xbf16>, vector<192x64xbf16>, vector<16x64xf32> -> vector<16x64xf32>
    %c0_3 = arith.constant 0 : index
    %c0_4 = arith.constant 0 : index
    %3 = vector.load %arg3[%c0_3, %c0_4] : memref<1x64xf32, #tpu.memory_space<vmem>>, vector<1x64xf32>
    %4 = vector.broadcast %3 : vector<1x64xf32> to vector<16x64xf32>
    %5 = arith.addf %2, %4 : vector<16x64xf32>
    %cst_5 = arith.constant 0.000000e+00 : f32
    %6 = vector.broadcast %cst_5 : f32 to vector<16x64xf32>
    %7 = arith.maximumf %5, %6 : vector<16x64xf32>
    %c0_6 = arith.constant 0 : index
    %c0_7 = arith.constant 0 : index
    %8 = vector.load %arg4[%c0_6, %c0_7] : memref<1x64xf32, #tpu.memory_space<vmem>>, vector<1x64xf32>
    %9 = vector.broadcast %8 : vector<1x64xf32> to vector<16x64xf32>
    %10 = arith.mulf %7, %9 : vector<16x64xf32>
    %c0_8 = arith.constant 0 : index
    %c0_9 = arith.constant 0 : index
    %11 = vector.load %arg5[%c0_8, %c0_9] : memref<1x64xf32, #tpu.memory_space<vmem>>, vector<1x64xf32>
    %12 = vector.broadcast %11 : vector<1x64xf32> to vector<16x64xf32>
    %13 = arith.addf %10, %12 : vector<16x64xf32>
    %c0_10 = arith.constant 0 : index
    %c0_11 = arith.constant 0 : index
    %14 = vector.load %arg6[%c0_10, %c0_11] : memref<16x64xf32, #tpu.memory_space<vmem>>, vector<16x64xf32>
    tpu.vector_store %arg6[%c0_10, %c0_11], %13 {strides = array<i32>} : memref<16x64xf32, #tpu.memory_space<vmem>>, vector<16x64xf32>,
    return
  }
  func.func @transform_0(%arg0: i32) -> (i32, i32) {
    %c0_i32 = arith.constant 0 : i32
    %c0_i32_0 = arith.constant 0 : i32
    return %arg0, %c0_i32 : i32, i32
  }
  func.func @transform_1(%arg0: i32) -> (i32, i32) {
    %c0_i32 = arith.constant 0 : i32
    %c0_i32_0 = arith.constant 0 : i32
    %c0_i32_1 = arith.constant 0 : i32
    return %c0_i32, %c0_i32_0 : i32, i32
  }
  func.func @transform_2(%arg0: i32) -> (i32, i32) {
    %c0_i32 = arith.constant 0 : i32
    %c0_i32_0 = arith.constant 0 : i32
    %c0_i32_1 = arith.constant 0 : i32
    return %c0_i32, %c0_i32_0 : i32, i32
  }
  func.func @transform_3(%arg0: i32) -> (i32, i32) {
    %c0_i32 = arith.constant 0 : i32
    %c0_i32_0 = arith.constant 0 : i32
    %c0_i32_1 = arith.constant 0 : i32
    return %c0_i32, %c0_i32_0 : i32, i32
  }
  func.func @transform_4(%arg0: i32) -> (i32, i32) {
    %c0_i32 = arith.constant 0 : i32
    %c0_i32_0 = arith.constant 0 : i32
    %c0_i32_1 = arith.constant 0 : i32
    return %c0_i32, %c0_i32_0 : i32, i32
  }
  func.func @transform_5(%arg0: i32) -> (i32, i32) {
    %c0_i32 = arith.constant 0 : i32
    %c0_i32_0 = arith.constant 0 : i32
    return %arg0, %c0_i32 : i32, i32
  }
}

module attributes {stable_mosaic.version = 11 : i64} {
  func.func @_qkv_skip_kernel(%arg0: i32, %arg1: memref<16x64xbf16, #tpu.memory_space<vmem>>, %arg2: memref<64x576xbf16, #tpu.memory_space<vmem>>, %arg3: memref<1x576xf32, #tpu.memory_space<vmem>>, %arg4: memref<64x192xbf16, #tpu.memory_space<vmem>>, %arg5: memref<1x192xf32, #tpu.memory_space<vmem>>, %arg6: memref<16x576xbf16, #tpu.memory_space<vmem>>, %arg7: memref<16x192xf32, #tpu.memory_space<vmem>>) attributes {dimension_semantics = [#tpu.dimension_semantics<parallel>], iteration_bounds = array<i64: 1>, scalar_prefetch = 0 : i64, scratch_operands = 0 : i64, tpu.core_type = #tpu.core_type<tc>, window_params = [{transform_indices = @transform_0, window_bounds = array<i64: 16, 64>}, {pipeline_mode = #tpu.pipeline_mode<synchronous>, transform_indices = @transform_1, window_bounds = array<i64: 64, 576>}, {pipeline_mode = #tpu.pipeline_mode<synchronous>, transform_indices = @transform_2, window_bounds = array<i64: 1, 576>}, {pipeline_mode = #tpu.pipeline_mode<synchronous>, transform_indices = @transform_3, window_bounds = array<i64: 64, 192>}, {pipeline_mode = #tpu.pipeline_mode<synchronous>, transform_indices = @transform_4, window_bounds = array<i64: 1, 192>}, {transform_indices = @transform_5, window_bounds = array<i64: 16, 576>}, {transform_indices = @transform_6, window_bounds = array<i64: 16, 192>}]} {
    %c0 = arith.constant 0 : index
    %c0_0 = arith.constant 0 : index
    %0 = vector.load %arg1[%c0, %c0_0] : memref<16x64xbf16, #tpu.memory_space<vmem>>, vector<16x64xbf16>
    %c0_1 = arith.constant 0 : index
    %c0_2 = arith.constant 0 : index
    %1 = vector.load %arg2[%c0_1, %c0_2] : memref<64x576xbf16, #tpu.memory_space<vmem>>, vector<64x576xbf16>
    %cst = arith.constant dense<0.000000e+00> : vector<16x576xf32>
    %2 = tpu.matmul %0, %1, %cst {dimension_numbers = #tpu.dot_dimension_numbers<[1], [0], [0], [1], [0, 0, 1, 1], [], []>} : vector<16x64xbf16>, vector<64x576xbf16>, vector<16x576xf32> -> vector<16x576xf32>
    %c0_3 = arith.constant 0 : index
    %c0_4 = arith.constant 0 : index
    %3 = vector.load %arg3[%c0_3, %c0_4] : memref<1x576xf32, #tpu.memory_space<vmem>>, vector<1x576xf32>
    %4 = vector.broadcast %3 : vector<1x576xf32> to vector<16x576xf32>
    %5 = arith.addf %2, %4 : vector<16x576xf32>
    %6 = arith.truncf %5 : vector<16x576xf32> to vector<16x576xbf16>
    %c0_5 = arith.constant 0 : index
    %c0_6 = arith.constant 0 : index
    %7 = vector.load %arg6[%c0_5, %c0_6] : memref<16x576xbf16, #tpu.memory_space<vmem>>, vector<16x576xbf16>
    tpu.vector_store %arg6[%c0_5, %c0_6], %6 {strides = array<i32>} : memref<16x576xbf16, #tpu.memory_space<vmem>>, vector<16x576xbf16>,
    %c0_7 = arith.constant 0 : index
    %c0_8 = arith.constant 0 : index
    %8 = vector.load %arg4[%c0_7, %c0_8] : memref<64x192xbf16, #tpu.memory_space<vmem>>, vector<64x192xbf16>
    %cst_9 = arith.constant dense<0.000000e+00> : vector<16x192xf32>
    %9 = tpu.matmul %0, %8, %cst_9 {dimension_numbers = #tpu.dot_dimension_numbers<[1], [0], [0], [1], [0, 0, 1, 1], [], []>} : vector<16x64xbf16>, vector<64x192xbf16>, vector<16x192xf32> -> vector<16x192xf32>
    %c0_10 = arith.constant 0 : index
    %c0_11 = arith.constant 0 : index
    %10 = vector.load %arg5[%c0_10, %c0_11] : memref<1x192xf32, #tpu.memory_space<vmem>>, vector<1x192xf32>
    %11 = vector.broadcast %10 : vector<1x192xf32> to vector<16x192xf32>
    %12 = arith.addf %9, %11 : vector<16x192xf32>
    %c0_12 = arith.constant 0 : index
    %c0_13 = arith.constant 0 : index
    %13 = vector.load %arg7[%c0_12, %c0_13] : memref<16x192xf32, #tpu.memory_space<vmem>>, vector<16x192xf32>
    tpu.vector_store %arg7[%c0_12, %c0_13], %12 {strides = array<i32>} : memref<16x192xf32, #tpu.memory_space<vmem>>, vector<16x192xf32>,
    return
  }
  func.func @transform_0(%arg0: i32) -> (i32, i32) {
    %c0_i32 = arith.constant 0 : i32
    %c0_i32_0 = arith.constant 0 : i32
    return %arg0, %c0_i32 : i32, i32
  }
  func.func @transform_1(%arg0: i32) -> (i32, i32) {
    %c0_i32 = arith.constant 0 : i32
    %c0_i32_0 = arith.constant 0 : i32
    %c0_i32_1 = arith.constant 0 : i32
    return %c0_i32, %c0_i32_0 : i32, i32
  }
  func.func @transform_2(%arg0: i32) -> (i32, i32) {
    %c0_i32 = arith.constant 0 : i32
    %c0_i32_0 = arith.constant 0 : i32
    %c0_i32_1 = arith.constant 0 : i32
    return %c0_i32, %c0_i32_0 : i32, i32
  }
  func.func @transform_3(%arg0: i32) -> (i32, i32) {
    %c0_i32 = arith.constant 0 : i32
    %c0_i32_0 = arith.constant 0 : i32
    %c0_i32_1 = arith.constant 0 : i32
    return %c0_i32, %c0_i32_0 : i32, i32
  }
  func.func @transform_4(%arg0: i32) -> (i32, i32) {
    %c0_i32 = arith.constant 0 : i32
    %c0_i32_0 = arith.constant 0 : i32
    %c0_i32_1 = arith.constant 0 : i32
    return %c0_i32, %c0_i32_0 : i32, i32
  }
  func.func @transform_5(%arg0: i32) -> (i32, i32) {
    %c0_i32 = arith.constant 0 : i32
    %c0_i32_0 = arith.constant 0 : i32
    return %arg0, %c0_i32 : i32, i32
  }
  func.func @transform_6(%arg0: i32) -> (i32, i32) {
    %c0_i32 = arith.constant 0 : i32
    %c0_i32_0 = arith.constant 0 : i32
    return %arg0, %c0_i32 : i32, i32
  }
}

module attributes {stable_mosaic.version = 11 : i64} {
  func.func @_linear_kernel(%arg0: i32, %arg1: memref<16x128xbf16, #tpu.memory_space<vmem>>, %arg2: memref<128x256xbf16, #tpu.memory_space<vmem>>, %arg3: memref<1x256xf32, #tpu.memory_space<vmem>>, %arg4: memref<16x256xf32, #tpu.memory_space<vmem>>) attributes {dimension_semantics = [#tpu.dimension_semantics<parallel>], iteration_bounds = array<i64: 1>, scalar_prefetch = 0 : i64, scratch_operands = 0 : i64, tpu.core_type = #tpu.core_type<tc>, window_params = [{transform_indices = @transform_0, window_bounds = array<i64: 16, 128>}, {pipeline_mode = #tpu.pipeline_mode<synchronous>, transform_indices = @transform_1, window_bounds = array<i64: 128, 256>}, {pipeline_mode = #tpu.pipeline_mode<synchronous>, transform_indices = @transform_2, window_bounds = array<i64: 1, 256>}, {transform_indices = @transform_3, window_bounds = array<i64: 16, 256>}]} {
    %c0 = arith.constant 0 : index
    %c0_0 = arith.constant 0 : index
    %0 = vector.load %arg1[%c0, %c0_0] : memref<16x128xbf16, #tpu.memory_space<vmem>>, vector<16x128xbf16>
    %c0_1 = arith.constant 0 : index
    %c0_2 = arith.constant 0 : index
    %1 = vector.load %arg2[%c0_1, %c0_2] : memref<128x256xbf16, #tpu.memory_space<vmem>>, vector<128x256xbf16>
    %cst = arith.constant dense<0.000000e+00> : vector<16x256xf32>
    %2 = tpu.matmul %0, %1, %cst {dimension_numbers = #tpu.dot_dimension_numbers<[1], [0], [0], [1], [0, 0, 1, 1], [], []>} : vector<16x128xbf16>, vector<128x256xbf16>, vector<16x256xf32> -> vector<16x256xf32>
    %c0_3 = arith.constant 0 : index
    %c0_4 = arith.constant 0 : index
    %3 = vector.load %arg3[%c0_3, %c0_4] : memref<1x256xf32, #tpu.memory_space<vmem>>, vector<1x256xf32>
    %4 = vector.broadcast %3 : vector<1x256xf32> to vector<16x256xf32>
    %5 = arith.addf %2, %4 : vector<16x256xf32>
    %cst_5 = arith.constant 0.000000e+00 : f32
    %6 = vector.broadcast %cst_5 : f32 to vector<16x256xf32>
    %7 = arith.maximumf %5, %6 : vector<16x256xf32>
    %c0_6 = arith.constant 0 : index
    %c0_7 = arith.constant 0 : index
    %8 = vector.load %arg4[%c0_6, %c0_7] : memref<16x256xf32, #tpu.memory_space<vmem>>, vector<16x256xf32>
    tpu.vector_store %arg4[%c0_6, %c0_7], %7 {strides = array<i32>} : memref<16x256xf32, #tpu.memory_space<vmem>>, vector<16x256xf32>,
    return
  }
  func.func @transform_0(%arg0: i32) -> (i32, i32) {
    %c0_i32 = arith.constant 0 : i32
    %c0_i32_0 = arith.constant 0 : i32
    return %arg0, %c0_i32 : i32, i32
  }
  func.func @transform_1(%arg0: i32) -> (i32, i32) {
    %c0_i32 = arith.constant 0 : i32
    %c0_i32_0 = arith.constant 0 : i32
    %c0_i32_1 = arith.constant 0 : i32
    return %c0_i32, %c0_i32_0 : i32, i32
  }
  func.func @transform_2(%arg0: i32) -> (i32, i32) {
    %c0_i32 = arith.constant 0 : i32
    %c0_i32_0 = arith.constant 0 : i32
    %c0_i32_1 = arith.constant 0 : i32
    return %c0_i32, %c0_i32_0 : i32, i32
  }
  func.func @transform_3(%arg0: i32) -> (i32, i32) {
    %c0_i32 = arith.constant 0 : i32
    %c0_i32_0 = arith.constant 0 : i32
    return %arg0, %c0_i32 : i32, i32
  }
}

module attributes {stable_mosaic.version = 11 : i64} {
  func.func @_linear_kernel(%arg0: i32, %arg1: memref<16x256xbf16, #tpu.memory_space<vmem>>, %arg2: memref<256x128xbf16, #tpu.memory_space<vmem>>, %arg3: memref<1x128xf32, #tpu.memory_space<vmem>>, %arg4: memref<16x128xf32, #tpu.memory_space<vmem>>) attributes {dimension_semantics = [#tpu.dimension_semantics<parallel>], iteration_bounds = array<i64: 1>, scalar_prefetch = 0 : i64, scratch_operands = 0 : i64, tpu.core_type = #tpu.core_type<tc>, window_params = [{transform_indices = @transform_0, window_bounds = array<i64: 16, 256>}, {pipeline_mode = #tpu.pipeline_mode<synchronous>, transform_indices = @transform_1, window_bounds = array<i64: 256, 128>}, {pipeline_mode = #tpu.pipeline_mode<synchronous>, transform_indices = @transform_2, window_bounds = array<i64: 1, 128>}, {transform_indices = @transform_3, window_bounds = array<i64: 16, 128>}]} {
    %c0 = arith.constant 0 : index
    %c0_0 = arith.constant 0 : index
    %0 = vector.load %arg1[%c0, %c0_0] : memref<16x256xbf16, #tpu.memory_space<vmem>>, vector<16x256xbf16>
    %c0_1 = arith.constant 0 : index
    %c0_2 = arith.constant 0 : index
    %1 = vector.load %arg2[%c0_1, %c0_2] : memref<256x128xbf16, #tpu.memory_space<vmem>>, vector<256x128xbf16>
    %cst = arith.constant dense<0.000000e+00> : vector<16x128xf32>
    %2 = tpu.matmul %0, %1, %cst {dimension_numbers = #tpu.dot_dimension_numbers<[1], [0], [0], [1], [0, 0, 1, 1], [], []>} : vector<16x256xbf16>, vector<256x128xbf16>, vector<16x128xf32> -> vector<16x128xf32>
    %c0_3 = arith.constant 0 : index
    %c0_4 = arith.constant 0 : index
    %3 = vector.load %arg3[%c0_3, %c0_4] : memref<1x128xf32, #tpu.memory_space<vmem>>, vector<1x128xf32>
    %4 = vector.broadcast %3 : vector<1x128xf32> to vector<16x128xf32>
    %5 = arith.addf %2, %4 : vector<16x128xf32>
    %cst_5 = arith.constant 0.000000e+00 : f32
    %6 = vector.broadcast %cst_5 : f32 to vector<16x128xf32>
    %7 = arith.maximumf %5, %6 : vector<16x128xf32>
    %c0_6 = arith.constant 0 : index
    %c0_7 = arith.constant 0 : index
    %8 = vector.load %arg4[%c0_6, %c0_7] : memref<16x128xf32, #tpu.memory_space<vmem>>, vector<16x128xf32>
    tpu.vector_store %arg4[%c0_6, %c0_7], %7 {strides = array<i32>} : memref<16x128xf32, #tpu.memory_space<vmem>>, vector<16x128xf32>,
    return
  }
  func.func @transform_0(%arg0: i32) -> (i32, i32) {
    %c0_i32 = arith.constant 0 : i32
    %c0_i32_0 = arith.constant 0 : i32
    return %arg0, %c0_i32 : i32, i32
  }
  func.func @transform_1(%arg0: i32) -> (i32, i32) {
    %c0_i32 = arith.constant 0 : i32
    %c0_i32_0 = arith.constant 0 : i32
    %c0_i32_1 = arith.constant 0 : i32
    return %c0_i32, %c0_i32_0 : i32, i32
  }
  func.func @transform_2(%arg0: i32) -> (i32, i32) {
    %c0_i32 = arith.constant 0 : i32
    %c0_i32_0 = arith.constant 0 : i32
    %c0_i32_1 = arith.constant 0 : i32
    return %c0_i32, %c0_i32_0 : i32, i32
  }
  func.func @transform_3(%arg0: i32) -> (i32, i32) {
    %c0_i32 = arith.constant 0 : i32
    %c0_i32_0 = arith.constant 0 : i32
    return %arg0, %c0_i32 : i32, i32
  }
}

module attributes {stable_mosaic.version = 11 : i64} {
  func.func @_linear_kernel(%arg0: i32, %arg1: memref<16x128xbf16, #tpu.memory_space<vmem>>, %arg2: memref<128x1xbf16, #tpu.memory_space<vmem>>, %arg3: memref<1x1xf32, #tpu.memory_space<vmem>>, %arg4: memref<16x1xf32, #tpu.memory_space<vmem>>) attributes {dimension_semantics = [#tpu.dimension_semantics<parallel>], iteration_bounds = array<i64: 1>, scalar_prefetch = 0 : i64, scratch_operands = 0 : i64, tpu.core_type = #tpu.core_type<tc>, window_params = [{transform_indices = @transform_0, window_bounds = array<i64: 16, 128>}, {pipeline_mode = #tpu.pipeline_mode<synchronous>, transform_indices = @transform_1, window_bounds = array<i64: 128, 1>}, {pipeline_mode = #tpu.pipeline_mode<synchronous>, transform_indices = @transform_2, window_bounds = array<i64: 1, 1>}, {transform_indices = @transform_3, window_bounds = array<i64: 16, 1>}]} {
    %c0 = arith.constant 0 : index
    %c0_0 = arith.constant 0 : index
    %0 = vector.load %arg1[%c0, %c0_0] : memref<16x128xbf16, #tpu.memory_space<vmem>>, vector<16x128xbf16>
    %c0_1 = arith.constant 0 : index
    %c0_2 = arith.constant 0 : index
    %1 = vector.load %arg2[%c0_1, %c0_2] : memref<128x1xbf16, #tpu.memory_space<vmem>>, vector<128x1xbf16>
    %cst = arith.constant dense<0.000000e+00> : vector<16x1xf32>
    %2 = tpu.matmul %0, %1, %cst {dimension_numbers = #tpu.dot_dimension_numbers<[1], [0], [0], [1], [0, 0, 1, 1], [], []>} : vector<16x128xbf16>, vector<128x1xbf16>, vector<16x1xf32> -> vector<16x1xf32>
    %c0_3 = arith.constant 0 : index
    %c0_4 = arith.constant 0 : index
    %3 = vector.load %arg3[%c0_3, %c0_4] : memref<1x1xf32, #tpu.memory_space<vmem>>, vector<1x1xf32>
    %4 = vector.broadcast %3 : vector<1x1xf32> to vector<16x1xf32>
    %5 = arith.addf %2, %4 : vector<16x1xf32>
    %c0_5 = arith.constant 0 : index
    %c0_6 = arith.constant 0 : index
    %6 = vector.load %arg4[%c0_5, %c0_6] : memref<16x1xf32, #tpu.memory_space<vmem>>, vector<16x1xf32>
    tpu.vector_store %arg4[%c0_5, %c0_6], %5 {strides = array<i32>} : memref<16x1xf32, #tpu.memory_space<vmem>>, vector<16x1xf32>,
    return
  }
  func.func @transform_0(%arg0: i32) -> (i32, i32) {
    %c0_i32 = arith.constant 0 : i32
    %c0_i32_0 = arith.constant 0 : i32
    return %arg0, %c0_i32 : i32, i32
  }
  func.func @transform_1(%arg0: i32) -> (i32, i32) {
    %c0_i32 = arith.constant 0 : i32
    %c0_i32_0 = arith.constant 0 : i32
    %c0_i32_1 = arith.constant 0 : i32
    return %c0_i32, %c0_i32_0 : i32, i32
  }
  func.func @transform_2(%arg0: i32) -> (i32, i32) {
    %c0_i32 = arith.constant 0 : i32
    %c0_i32_0 = arith.constant 0 : i32
    %c0_i32_1 = arith.constant 0 : i32
    return %c0_i32, %c0_i32_0 : i32, i32
  }
  func.func @transform_3(%arg0: i32) -> (i32, i32) {
    %c0_i32 = arith.constant 0 : i32
    %c0_i32_0 = arith.constant 0 : i32
    return %arg0, %c0_i32 : i32, i32
  }
}

</mosaic_0001>

<llo_original>
// kernel: gnn_forward.19
$region0: #{gnn_forward.19}
  #allocation0 [shape = 'u32[]', space=smem, size = 0x4, offset = 0x4, fixed_abs, tag = 'smem constant byte address 0x4 - core index']
  #allocation1 [shape = 'u32[144,128]{1,0:T(1,128)}', space=vmem, size = 0x12000, scoped, tag = 'internal scratch']
  %s0 = inlined_call_operand.vmem [shape: bf16[16,8], index: 0, kind: input, shape index: {}]
  %s1 = inlined_call_operand.vmem [shape: bf16[8,576], index: 1, kind: input, shape index: {}]
  %s2 = inlined_call_operand.vmem [shape: f32[1,576], index: 2, kind: input, shape index: {}]
  %s3 = inlined_call_operand.vmem [shape: bf16[8,192], index: 3, kind: input, shape index: {}]
  %s4 = inlined_call_operand.vmem [shape: f32[1,192], index: 4, kind: input, shape index: {}]
  %s5 = inlined_call_operand.vmem [shape: bf16[16,576], index: 5, kind: output, shape index: {0}]
  %s6 = inlined_call_operand.vmem [shape: f32[16,192], index: 6, kind: output, shape index: {1}]
  %7 = xla_tuple %s5, %s6
  %s8 = sld [smem:[#allocation0]]
  $region38: #{gnn_forward.19} parent=0
    _
  %s10 = ssub.s32 1, %s8
  %s11 = scalar_select 0, %s10, %s8
  // Predicated region
  $region2: #{gnn_forward.19} parent=0 // pred_check
    _
  $region3: #{gnn_forward.19} parent=0 // pred_check_branch
    %13 = sbr.rel (0) target = $region5
  $region4: #{gnn_forward.19} parent=0 // pred_region
    _
  $region5: #{gnn_forward.19} parent=0 // pred_fallthru
    _
  // Predicated region
  $region6: #{gnn_forward.19} parent=0 // pred_check
    _
  $region7: #{gnn_forward.19} parent=0 // pred_check_branch
    %15 = sbr.rel (0) target = $region9
  $region8: #{gnn_forward.19} parent=0 // pred_region
    _
  $region9: #{gnn_forward.19} parent=0 // pred_fallthru
    _
  // Predicated region
  $region10: #{gnn_forward.19} parent=0 // pred_check
    _
  $region11: #{gnn_forward.19} parent=0 // pred_check_branch
    %17 = sbr.rel (0) target = $region13
  $region12: #{gnn_forward.19} parent=0 // pred_region
    _
  $region13: #{gnn_forward.19} parent=0 // pred_fallthru
    _
  // Predicated region
  $region14: #{gnn_forward.19} parent=0 // pred_check
    _
  $region15: #{gnn_forward.19} parent=0 // pred_check_branch
    %19 = sbr.rel (0) target = $region17
  $region16: #{gnn_forward.19} parent=0 // pred_region
    _
  $region17: #{gnn_forward.19} parent=0 // pred_fallthru
    _
  // Predicated region
  $region18: #{gnn_forward.19} parent=0 // pred_check
    _
  $region19: #{gnn_forward.19} parent=0 // pred_check_branch
    %21 = sbr.rel (0) target = $region21
  $region20: #{gnn_forward.19} parent=0 // pred_region
    _
  $region21: #{gnn_forward.19} parent=0 // pred_fallthru
    _
  %v23 = vld [vmem:[%s0] sm:$0xf]
  %v24 = vld [vmem:[%s0 + $0x4] sm:$0xf]
  %v25 = vld [vmem:[%s1] sm:$0xff]
  %v26 = vld [vmem:[%s1 + $0x8] sm:$0xff]
  %v27 = vld [vmem:[%s1 + $0x10] sm:$0xf]
  %v28 = vld [vmem:[%s2] sm:$0x1f]
  %v30 = vlaneseq
  %v31 = vshrl.u32 %v30, 7
  %v32 = vsub.s32 0, %v31
  %v33 = vrot.slane %v28, %v32
  %v34 = vlaneseq
  %v35 = vshrl.u32 %v34, 7
  %v36 = vsub.s32 1, %v35
  %v37 = vrot.slane %v28, %v36
  %v38 = vlaneseq
  %v39 = vshrl.u32 %v38, 7
  %v40 = vsub.s32 2, %v39
  %v41 = vrot.slane %v28, %v40
  %v42 = vlaneseq
  %v43 = vshrl.u32 %v42, 7
  %v44 = vsub.s32 3, %v43
  %v45 = vrot.slane %v28, %v44
  %v46 = vlaneseq
  %v47 = vshrl.u32 %v46, 7
  %v48 = vsub.s32 4, %v47
  %v49 = vrot.slane %v28, %v48
  %v57 = vunpack.c.l.b16 %v23
  %v58 = vunpack.c.l.b16 %v24
  %v59 = vpack.c.b16 %v58, %v57
  %v63 = vunpack.c.l.b16 %v25
  %v64 = vunpack.c.h.b16 %v25
  %v65 = vunpack.c.l.b16 %v26
  %v66 = vunpack.c.h.b16 %v26
  %v67 = vunpack.c.l.b16 %v27
  %v68 = vpack.c.b16 %v63, %v63
  %v69 = vpack.c.b16 %v64, %v64
  %v70 = vpack.c.b16 %v65, %v65
  %v71 = vpack.c.b16 %v66, %v66
  %v72 = vpack.c.b16 %v67, %v67
  %vm73 = vcmask 64512
  %v75 = vsel %vm73, %v59, 0
  %vm77 = vcmask 1043456
  %v79 = vsel %vm77, %v68, 0
  %v82 = vsel %vm77, %v69, 0
  %v85 = vsel %vm77, %v70, 0
  %v88 = vsel %vm77, %v71, 0
  %v91 = vsel %vm77, %v72, 0
  %93 = vmatprep.subr.bf16.mxu0 %v82
  %94 = vmatpush1.bf16.msra.mxu0 %v79
  %95 = vmatprep.subr.bf16.mxu0 0
  %96 = vmatpush1.bf16.msra.mxu0 0
  %97 = vmatprep.subr.bf16.mxu0 0
  %98 = vmatpush1.bf16.msra.mxu0 0
  %99 = vmatprep.subr.bf16.mxu0 0
  %100 = vmatpush1.bf16.msra.mxu0 0
  %101 = vmatprep.subr.bf16.mxu0 0
  %102 = vmatpush1.bf16.msra.mxu0 0
  %103 = vmatprep.subr.bf16.mxu0 0
  %104 = vmatpush1.bf16.msra.mxu0 0
  %105 = vmatprep.subr.bf16.mxu0 0
  %106 = vmatpush1.bf16.msra.mxu0 0
  %107 = vmatprep.subr.bf16.mxu0 0
  %108 = vmatpush1.bf16.msra.mxu0 0
  %109 = vmatprep.subr.bf16.mxu0 0
  %110 = vmatpush1.bf16.msra.mxu0 0
  %111 = vmatprep.subr.bf16.mxu0 0
  %112 = vmatpush1.bf16.msra.mxu0 0
  %113 = vmatprep.subr.bf16.mxu0 0
  %114 = vmatpush1.bf16.msra.mxu0 0
  %115 = vmatprep.subr.bf16.mxu0 0
  %116 = vmatpush1.bf16.msra.mxu0 0
  %117 = vmatprep.subr.bf16.mxu0 0
  %118 = vmatpush1.bf16.msra.mxu0 0
  %119 = vmatprep.subr.bf16.mxu0 0
  %120 = vmatpush1.bf16.msra.mxu0 0
  %121 = vmatprep.subr.bf16.mxu0 0
  %122 = vmatpush1.bf16.msra.mxu0 0
  %123 = vmatprep.subr.bf16.mxu0 0
  %124 = vmatpush1.bf16.msra.mxu0 0
  %125 = vmatprep.mubr.bf16.mxu0 0
  %126 = vmatmul.mubr.bf16.gmra.mrb[0].mxu0 %v75
  %v127 = vpop.f32.mrb[0].mxu0
  %v128 = vadd.f32 %v33, %v127
  %v129 = vpop.f32.mrb[0].mxu0
  %v130 = vadd.f32 %v37, %v129
  %v131 = vpop.f32.mrb[0].mxu0
  %v132 = vadd.f32 %v33, %v131
  %v133 = vpop.f32.mrb[0].mxu0
  %v134 = vadd.f32 %v37, %v133
  %135 = vdwg.mxu0
  %136 = vmatprep.subr.bf16.mxu0 %v88
  %137 = vmatpush1.bf16.msra.mxu0 %v85
  %138 = vmatprep.subr.bf16.mxu0 0
  %139 = vmatpush1.bf16.msra.mxu0 0
  %140 = vmatprep.subr.bf16.mxu0 0
  %141 = vmatpush1.bf16.msra.mxu0 0
  %142 = vmatprep.subr.bf16.mxu0 0
  %143 = vmatpush1.bf16.msra.mxu0 0
  %144 = vmatprep.subr.bf16.mxu0 0
  %145 = vmatpush1.bf16.msra.mxu0 0
  %146 = vmatprep.subr.bf16.mxu0 0
  %147 = vmatpush1.bf16.msra.mxu0 0
  %148 = vmatprep.subr.bf16.mxu0 0
  %149 = vmatpush1.bf16.msra.mxu0 0
  %150 = vmatprep.subr.bf16.mxu0 0
  %151 = vmatpush1.bf16.msra.mxu0 0
  %152 = vmatprep.subr.bf16.mxu0 0
  %153 = vmatpush1.bf16.msra.mxu0 0
  %154 = vmatprep.subr.bf16.mxu0 0
  %155 = vmatpush1.bf16.msra.mxu0 0
  %156 = vmatprep.subr.bf16.mxu0 0
  %157 = vmatpush1.bf16.msra.mxu0 0
  %158 = vmatprep.subr.bf16.mxu0 0
  %159 = vmatpush1.bf16.msra.mxu0 0
  %160 = vmatprep.subr.bf16.mxu0 0
  %161 = vmatpush1.bf16.msra.mxu0 0
  %162 = vmatprep.subr.bf16.mxu0 0
  %163 = vmatpush1.bf16.msra.mxu0 0
  %164 = vmatprep.subr.bf16.mxu0 0
  %165 = vmatpush1.bf16.msra.mxu0 0
  %166 = vmatprep.subr.bf16.mxu0 0
  %167 = vmatpush1.bf16.msra.mxu0 0
  %168 = vmatprep.mubr.bf16.mxu0 0
  %169 = vmatmul.mubr.bf16.gmra.mrb[0].mxu0 %v75
  %v170 = vpop.f32.mrb[0].mxu0
  %v171 = vadd.f32 %v41, %v170
  %v172 = vpop.f32.mrb[0].mxu0
  %v173 = vadd.f32 %v45, %v172
  %v174 = vpop.f32.mrb[0].mxu0
  %v175 = vadd.f32 %v41, %v174
  %v176 = vpop.f32.mrb[0].mxu0
  %v177 = vadd.f32 %v45, %v176
  %178 = vdwg.mxu0
  %179 = vmatprep.subr.bf16.mxu0 0
  %180 = vmatpush1.bf16.msra.mxu0 %v91
  %181 = vmatprep.subr.bf16.mxu0 0
  %182 = vmatpush1.bf16.msra.mxu0 0
  %183 = vmatprep.subr.bf16.mxu0 0
  %184 = vmatpush1.bf16.msra.mxu0 0
  %185 = vmatprep.subr.bf16.mxu0 0
  %186 = vmatpush1.bf16.msra.mxu0 0
  %187 = vmatprep.subr.bf16.mxu0 0
  %188 = vmatpush1.bf16.msra.mxu0 0
  %189 = vmatprep.subr.bf16.mxu0 0
  %190 = vmatpush1.bf16.msra.mxu0 0
  %191 = vmatprep.subr.bf16.mxu0 0
  %192 = vmatpush1.bf16.msra.mxu0 0
  %193 = vmatprep.subr.bf16.mxu0 0
  %194 = vmatpush1.bf16.msra.mxu0 0
  %195 = vmatprep.subr.bf16.mxu0 0
  %196 = vmatpush1.bf16.msra.mxu0 0
  %197 = vmatprep.subr.bf16.mxu0 0
  %198 = vmatpush1.bf16.msra.mxu0 0
  %199 = vmatprep.subr.bf16.mxu0 0
  %200 = vmatpush1.bf16.msra.mxu0 0
  %201 = vmatprep.subr.bf16.mxu0 0
  %202 = vmatpush1.bf16.msra.mxu0 0
  %203 = vmatprep.subr.bf16.mxu0 0
  %204 = vmatpush1.bf16.msra.mxu0 0
  %205 = vmatprep.subr.bf16.mxu0 0
  %206 = vmatpush1.bf16.msra.mxu0 0
  %207 = vmatprep.subr.bf16.mxu0 0
  %208 = vmatpush1.bf16.msra.mxu0 0
  %209 = vmatprep.subr.bf16.mxu0 0
  %210 = vmatpush1.bf16.msra.mxu0 0
  %211 = vmatprep.mubr.bf16.mxu0 0
  %212 = vmatmul.mubr.bf16.gmra.mrb[0].mxu0 %v75
  %v213 = vpop.f32.mrb[0].mxu0
  %v214 = vadd.f32 %v49, %v213
  %v215 = vpop.f32.mrb[0].mxu0
  %v216 = vpop.f32.mrb[0].mxu0
  %v217 = vadd.f32 %v49, %v216
  %v218 = vpop.f32.mrb[0].mxu0
  %219 = vdwg.mxu0
  %v220 = vpack.c.bf16 %v132, %v128
  %v221 = vpack.c.bf16 %v134, %v130
  %v222 = vpack.c.bf16 %v175, %v171
  %v223 = vpack.c.bf16 %v177, %v173
  %v224 = vpack.c.bf16 %v217, %v214
  %v230 = vunpack.c.l.b16 %v220
  %v231 = vunpack.c.l.b16 %v221
  %v232 = vunpack.c.l.b16 %v222
  %v233 = vunpack.c.l.b16 %v223
  %v234 = vunpack.c.l.b16 %v224
  %v235 = vunpack.c.h.b16 %v220
  %v236 = vunpack.c.h.b16 %v221
  %v237 = vunpack.c.h.b16 %v222
  %v238 = vunpack.c.h.b16 %v223
  %v239 = vunpack.c.h.b16 %v224
  %v240 = vpack.c.b16 %v231, %v230
  %v241 = vpack.c.b16 %v233, %v232
  %v242 = vpack.c.b16 %v234, %v234
  %v243 = vpack.c.b16 %v236, %v235
  %v244 = vpack.c.b16 %v238, %v237
  %v245 = vpack.c.b16 %v239, %v239
  %252 = vst [vmem:[%s5] sm:$0xff] %v240
  %253 = vst [vmem:[%s5 + $0x8] sm:$0xff] %v241
  %vm254 = vcmask 519168
  %255 = vst.msk [vmem:[%s5 + $0x10] sm:$0xf] %vm254, %v242
  %256 = vst [vmem:[%s5 + $0x14] sm:$0xff] %v243
  %257 = vst [vmem:[%s5 + $0x1c] sm:$0xff] %v244
  %258 = vst.msk [vmem:[%s5 + $0x24] sm:$0xf] %vm254, %v245
  %v259 = vld [vmem:[%s3] sm:$0xff]
  %v260 = vld [vmem:[%s4] sm:$0x3]
  %v262 = vlaneseq
  %v263 = vshrl.u32 %v262, 7
  %v264 = vsub.s32 0, %v263
  %v265 = vrot.slane %v260, %v264
  %v266 = vlaneseq
  %v267 = vshrl.u32 %v266, 7
  %v268 = vsub.s32 1, %v267
  %v269 = vrot.slane %v260, %v268
  %v273 = vunpack.c.l.b16 %v259
  %v274 = vunpack.c.h.b16 %v259
  %v275 = vpack.c.b16 %v273, %v273
  %v276 = vpack.c.b16 %v274, %v274
  %v278 = vsel %vm77, %v275, 0
  %v281 = vsel %vm77, %v276, 0
  %283 = vmatprep.subr.bf16.mxu0 %v281
  %284 = vmatpush1.bf16.msra.mxu0 %v278
  %285 = vmatprep.subr.bf16.mxu0 0
  %286 = vmatpush1.bf16.msra.mxu0 0
  %287 = vmatprep.subr.bf16.mxu0 0
  %288 = vmatpush1.bf16.msra.mxu0 0
  %289 = vmatprep.subr.bf16.mxu0 0
  %290 = vmatpush1.bf16.msra.mxu0 0
  %291 = vmatprep.subr.bf16.mxu0 0
  %292 = vmatpush1.bf16.msra.mxu0 0
  %293 = vmatprep.subr.bf16.mxu0 0
  %294 = vmatpush1.bf16.msra.mxu0 0
  %295 = vmatprep.subr.bf16.mxu0 0
  %296 = vmatpush1.bf16.msra.mxu0 0
  %297 = vmatprep.subr.bf16.mxu0 0
  %298 = vmatpush1.bf16.msra.mxu0 0
  %299 = vmatprep.subr.bf16.mxu0 0
  %300 = vmatpush1.bf16.msra.mxu0 0
  %301 = vmatprep.subr.bf16.mxu0 0
  %302 = vmatpush1.bf16.msra.mxu0 0
  %303 = vmatprep.subr.bf16.mxu0 0
  %304 = vmatpush1.bf16.msra.mxu0 0
  %305 = vmatprep.subr.bf16.mxu0 0
  %306 = vmatpush1.bf16.msra.mxu0 0
  %307 = vmatprep.subr.bf16.mxu0 0
  %308 = vmatpush1.bf16.msra.mxu0 0
  %309 = vmatprep.subr.bf16.mxu0 0
  %310 = vmatpush1.bf16.msra.mxu0 0
  %311 = vmatprep.subr.bf16.mxu0 0
  %312 = vmatpush1.bf16.msra.mxu0 0
  %313 = vmatprep.subr.bf16.mxu0 0
  %314 = vmatpush1.bf16.msra.mxu0 0
  %315 = vmatprep.mubr.bf16.mxu0 0
  %316 = vmatmul.mubr.bf16.gmra.mrb[0].mxu0 %v75
  %v317 = vpop.f32.mrb[0].mxu0
  %v318 = vadd.f32 %v265, %v317
  %v319 = vpop.f32.mrb[0].mxu0
  %v320 = vadd.f32 %v269, %v319
  %v321 = vpop.f32.mrb[0].mxu0
  %v322 = vadd.f32 %v265, %v321
  %v323 = vpop.f32.mrb[0].mxu0
  %v324 = vadd.f32 %v269, %v323
  %325 = vdwg.mxu0
  %326 = vst [vmem:[%s6] sm:$0xff] %v318
  %vm327 = vcmask 523264
  %328 = vst.msk [vmem:[%s6 + $0x8] sm:$0xff] %vm327, %v320
  %329 = vst [vmem:[%s6 + $0x10] sm:$0xff] %v322
  %330 = vst.msk [vmem:[%s6 + $0x18] sm:$0xff] %vm327, %v324
  // Predicated region
  $region22: #{gnn_forward.19} parent=0 // pred_check
    _
  $region23: #{gnn_forward.19} parent=0 // pred_check_branch
    %332 = sbr.rel (0) target = $region25
  $region24: #{gnn_forward.19} parent=0 // pred_region
    _
  $region25: #{gnn_forward.19} parent=0 // pred_fallthru
    _
  // Predicated region
  $region26: #{gnn_forward.19} parent=0 // pred_check
    _
  $region27: #{gnn_forward.19} parent=0 // pred_check_branch
    %334 = sbr.rel (0) target = $region29
  $region28: #{gnn_forward.19} parent=0 // pred_region
    _
  $region29: #{gnn_forward.19} parent=0 // pred_fallthru
    _
  // Predicated region
  $region30: #{gnn_forward.19} parent=0 // pred_check
    _
  $region31: #{gnn_forward.19} parent=0 // pred_check_branch
    %336 = sbr.rel (0) target = $region33
  $region32: #{gnn_forward.19} parent=0 // pred_region
    _
  $region33: #{gnn_forward.19} parent=0 // pred_fallthru
    _
  // Predicated region
  $region34: #{gnn_forward.19} parent=0 // pred_check
    _
  $region35: #{gnn_forward.19} parent=0 // pred_check_branch
    %338 = sbr.rel (0) target = $region37
  $region36: #{gnn_forward.19} parent=0 // pred_region
    _
  $region37: #{gnn_forward.19} parent=0 // pred_fallthru
    _

// kernel: gnn_forward.20
$region0: #{gnn_forward.20}
  #allocation0 [shape = 'u32[]', space=smem, size = 0x4, offset = 0x4, fixed_abs, tag = 'smem constant byte address 0x4 - core index']
  #allocation1 [shape = 'u32[144,128]{1,0:T(1,128)}', space=vmem, size = 0x12000, scoped, tag = 'internal scratch']
  %s0 = inlined_call_operand.vmem [shape: bf16[48,192], index: 0, kind: input, shape index: {}]
  %s1 = inlined_call_operand.vmem [shape: bf16[48,192], index: 1, kind: input, shape index: {}]
  %s2 = inlined_call_operand.vmem [shape: bf16[48,192], index: 2, kind: input, shape index: {}]
  %s3 = inlined_call_operand.vmem [shape: bf16[48,4], index: 3, kind: input, shape index: {}]
  %s4 = inlined_call_operand.vmem [shape: bf16[4,192], index: 4, kind: input, shape index: {}]
  %s5 = inlined_call_operand.vmem [shape: f32[48,3], index: 5, kind: output, shape index: {0}]
  %s6 = inlined_call_operand.vmem [shape: f32[48,192], index: 6, kind: output, shape index: {1}]
  %7 = xla_tuple %s5, %s6
  %s8 = sld [smem:[#allocation0]]
  $region38: #{gnn_forward.20} parent=0
    _
  %s10 = ssub.s32 1, %s8
  %s11 = scalar_select 0, %s10, %s8
  // Predicated region
  $region2: #{gnn_forward.20} parent=0 // pred_check
    _
  $region3: #{gnn_forward.20} parent=0 // pred_check_branch
    %13 = sbr.rel (0) target = $region5
  $region4: #{gnn_forward.20} parent=0 // pred_region
    _
  $region5: #{gnn_forward.20} parent=0 // pred_fallthru
    _
  // Predicated region
  $region6: #{gnn_forward.20} parent=0 // pred_check
    _
  $region7: #{gnn_forward.20} parent=0 // pred_check_branch
    %15 = sbr.rel (0) target = $region9
  $region8: #{gnn_forward.20} parent=0 // pred_region
    _
  $region9: #{gnn_forward.20} parent=0 // pred_fallthru
    _
  // Predicated region
  $region10: #{gnn_forward.20} parent=0 // pred_check
    _
  $region11: #{gnn_forward.20} parent=0 // pred_check_branch
    %17 = sbr.rel (0) target = $region13
  $region12: #{gnn_forward.20} parent=0 // pred_region
    _
  $region13: #{gnn_forward.20} parent=0 // pred_fallthru
    _
  // Predicated region
  $region14: #{gnn_forward.20} parent=0 // pred_check
    _
  $region15: #{gnn_forward.20} parent=0 // pred_check_branch
    %19 = sbr.rel (0) target = $region17
  $region16: #{gnn_forward.20} parent=0 // pred_region
    _
  $region17: #{gnn_forward.20} parent=0 // pred_fallthru
    _
  // Predicated region
  $region18: #{gnn_forward.20} parent=0 // pred_check
    _
  $region19: #{gnn_forward.20} parent=0 // pred_check_branch
    %21 = sbr.rel (0) target = $region21
  $region20: #{gnn_forward.20} parent=0 // pred_region
    _
  $region21: #{gnn_forward.20} parent=0 // pred_fallthru
    _
  %v23 = vld [vmem:[%s3] sm:$0xf]
  %v24 = vld [vmem:[%s3 + $0x4] sm:$0xf]
  %v25 = vld [vmem:[%s3 + $0x8] sm:$0xf]
  %v26 = vld [vmem:[%s3 + $0xc] sm:$0xf]
  %v27 = vld [vmem:[%s3 + $0x10] sm:$0xf]
  %v28 = vld [vmem:[%s3 + $0x14] sm:$0xf]
  %v29 = vld [vmem:[%s4] sm:$0xf]
  %v36 = vunpack.c.l.b16 %v23
  %v37 = vunpack.c.l.b16 %v24
  %v38 = vunpack.c.l.b16 %v25
  %v39 = vunpack.c.l.b16 %v26
  %v40 = vunpack.c.l.b16 %v27
  %v41 = vunpack.c.l.b16 %v28
  %v42 = vpack.c.b16 %v37, %v36
  %v43 = vpack.c.b16 %v39, %v38
  %v44 = vpack.c.b16 %v41, %v40
  %v47 = vunpack.c.l.s4 1983009808
  %v48 = vunpack.c.0.s8 %v47
  %v49 = vlaneseq
  %v50 = vshrl.u32 %v49, 7
  %v51 = vsub.s32 %v48, %v50
  %v52 = vrot.slane %v29, %v51
  %v53 = vcombine.high %v52, %v52
  %vm54 = vcmask 31744
  %v56 = vsel %vm54, %v42, 0
  %v59 = vsel %vm54, %v43, 0
  %v62 = vsel %vm54, %v44, 0
  %vm64 = vcmask 1041408
  %v66 = vsel %vm64, %v52, 0
  %v69 = vsel %vm64, %v53, 0
  %71 = vmatprep.subr.bf16.mxu0 %v69
  %72 = vmatpush1.bf16.msra.mxu0 %v66
  %73 = vmatprep.subr.bf16.mxu0 0
  %74 = vmatpush1.bf16.msra.mxu0 0
  %75 = vmatprep.subr.bf16.mxu0 0
  %76 = vmatpush1.bf16.msra.mxu0 0
  %77 = vmatprep.subr.bf16.mxu0 0
  %78 = vmatpush1.bf16.msra.mxu0 0
  %79 = vmatprep.subr.bf16.mxu0 0
  %80 = vmatpush1.bf16.msra.mxu0 0
  %81 = vmatprep.subr.bf16.mxu0 0
  %82 = vmatpush1.bf16.msra.mxu0 0
  %83 = vmatprep.subr.bf16.mxu0 0
  %84 = vmatpush1.bf16.msra.mxu0 0
  %85 = vmatprep.subr.bf16.mxu0 0
  %86 = vmatpush1.bf16.msra.mxu0 0
  %87 = vmatprep.subr.bf16.mxu0 0
  %88 = vmatpush1.bf16.msra.mxu0 0
  %89 = vmatprep.subr.bf16.mxu0 0
  %90 = vmatpush1.bf16.msra.mxu0 0
  %91 = vmatprep.subr.bf16.mxu0 0
  %92 = vmatpush1.bf16.msra.mxu0 0
  %93 = vmatprep.subr.bf16.mxu0 0
  %94 = vmatpush1.bf16.msra.mxu0 0
  %95 = vmatprep.subr.bf16.mxu0 0
  %96 = vmatpush1.bf16.msra.mxu0 0
  %97 = vmatprep.subr.bf16.mxu0 0
  %98 = vmatpush1.bf16.msra.mxu0 0
  %99 = vmatprep.subr.bf16.mxu0 0
  %100 = vmatpush1.bf16.msra.mxu0 0
  %101 = vmatprep.subr.bf16.mxu0 0
  %102 = vmatpush1.bf16.msra.mxu0 0
  %103 = vmatprep.mubr.bf16.mxu0 0
  %104 = vmatmul.mubr.bf16.gmra.mrb[0].mxu0 %v56
  %v105 = vpop.f32.mrb[0].mxu0
  %v106 = vadd.f32 0.0, %v105
  %v107 = vpop.f32.mrb[0].mxu0
  %v108 = vadd.f32 0.0, %v107
  %v109 = vpop.f32.mrb[0].mxu0
  %v110 = vadd.f32 0.0, %v109
  %v111 = vpop.f32.mrb[0].mxu0
  %v112 = vadd.f32 0.0, %v111
  %113 = vmatprep.mubr.bf16.mxu0 0
  %114 = vmatmul.mubr.bf16.gmra.mrb[0].mxu0 %v59
  %v115 = vpop.f32.mrb[0].mxu0
  %v116 = vadd.f32 0.0, %v115
  %v117 = vpop.f32.mrb[0].mxu0
  %v118 = vadd.f32 0.0, %v117
  %v119 = vpop.f32.mrb[0].mxu0
  %v120 = vadd.f32 0.0, %v119
  %v121 = vpop.f32.mrb[0].mxu0
  %v122 = vadd.f32 0.0, %v121
  %123 = vmatprep.mubr.bf16.mxu0 0
  %124 = vmatmul.mubr.bf16.gmra.mrb[0].mxu0 %v62
  %v125 = vpop.f32.mrb[0].mxu0
  %v126 = vadd.f32 0.0, %v125
  %v127 = vpop.f32.mrb[0].mxu0
  %v128 = vadd.f32 0.0, %v127
  %v129 = vpop.f32.mrb[0].mxu0
  %v130 = vadd.f32 0.0, %v129
  %v131 = vpop.f32.mrb[0].mxu0
  %v132 = vadd.f32 0.0, %v131
  %133 = vdwg.mxu0
  %v134 = vld [vmem:[%s0] sm:$0xff]
  %v135 = vld [vmem:[%s0 + $0x8] sm:$0xff]
  %v136 = vld [vmem:[%s0 + $0x10] sm:$0xff]
  %v137 = vld [vmem:[%s0 + $0x18] sm:$0xff]
  %v138 = vld [vmem:[%s0 + $0x20] sm:$0xff]
  %v139 = vld [vmem:[%s0 + $0x28] sm:$0xff]
  %v140 = vunpack.c.l.bf16 %v134
  %v141 = vunpack.c.h.bf16 %v134
  %v142 = vunpack.c.l.bf16 %v135
  %v143 = vunpack.c.h.bf16 %v135
  %v144 = vunpack.c.l.bf16 %v136
  %v145 = vunpack.c.h.bf16 %v136
  %v146 = vunpack.c.l.bf16 %v137
  %v147 = vunpack.c.h.bf16 %v137
  %v148 = vunpack.c.l.bf16 %v138
  %v149 = vunpack.c.h.bf16 %v138
  %v150 = vunpack.c.l.bf16 %v139
  %v151 = vunpack.c.h.bf16 %v139
  %v152 = vld [vmem:[%s1] sm:$0xff]
  %v153 = vld [vmem:[%s1 + $0x8] sm:$0xff]
  %v154 = vld [vmem:[%s1 + $0x10] sm:$0xff]
  %v155 = vld [vmem:[%s1 + $0x18] sm:$0xff]
  %v156 = vld [vmem:[%s1 + $0x20] sm:$0xff]
  %v157 = vld [vmem:[%s1 + $0x28] sm:$0xff]
  %v158 = vunpack.c.l.bf16 %v152
  %v159 = vunpack.c.h.bf16 %v152
  %v160 = vunpack.c.l.bf16 %v153
  %v161 = vunpack.c.h.bf16 %v153
  %v162 = vunpack.c.l.bf16 %v154
  %v163 = vunpack.c.h.bf16 %v154
  %v164 = vunpack.c.l.bf16 %v155
  %v165 = vunpack.c.h.bf16 %v155
  %v166 = vunpack.c.l.bf16 %v156
  %v167 = vunpack.c.h.bf16 %v156
  %v168 = vunpack.c.l.bf16 %v157
  %v169 = vunpack.c.h.bf16 %v157
  %v170 = vadd.f32 %v158, %v106
  %v171 = vadd.f32 %v159, %v108
  %v172 = vadd.f32 %v160, %v110
  %v173 = vadd.f32 %v161, %v112
  %v174 = vadd.f32 %v162, %v116
  %v175 = vadd.f32 %v163, %v118
  %v176 = vadd.f32 %v164, %v120
  %v177 = vadd.f32 %v165, %v122
  %v178 = vadd.f32 %v166, %v126
  %v179 = vadd.f32 %v167, %v128
  %v180 = vadd.f32 %v168, %v130
  %v181 = vadd.f32 %v169, %v132
  %v182 = vld [vmem:[%s2] sm:$0xff]
  %v183 = vld [vmem:[%s2 + $0x8] sm:$0xff]
  %v184 = vld [vmem:[%s2 + $0x10] sm:$0xff]
  %v185 = vld [vmem:[%s2 + $0x18] sm:$0xff]
  %v186 = vld [vmem:[%s2 + $0x20] sm:$0xff]
  %v187 = vld [vmem:[%s2 + $0x28] sm:$0xff]
  %v188 = vunpack.c.l.bf16 %v182
  %v189 = vunpack.c.h.bf16 %v182
  %v190 = vunpack.c.l.bf16 %v183
  %v191 = vunpack.c.h.bf16 %v183
  %v192 = vunpack.c.l.bf16 %v184
  %v193 = vunpack.c.h.bf16 %v184
  %v194 = vunpack.c.l.bf16 %v185
  %v195 = vunpack.c.h.bf16 %v185
  %v196 = vunpack.c.l.bf16 %v186
  %v197 = vunpack.c.h.bf16 %v186
  %v198 = vunpack.c.l.bf16 %v187
  %v199 = vunpack.c.h.bf16 %v187
  %v200 = vadd.f32 %v188, %v106
  %v201 = vadd.f32 %v189, %v108
  %v202 = vadd.f32 %v190, %v110
  %v203 = vadd.f32 %v191, %v112
  %v204 = vadd.f32 %v192, %v116
  %v205 = vadd.f32 %v193, %v118
  %v206 = vadd.f32 %v194, %v120
  %v207 = vadd.f32 %v195, %v122
  %v208 = vadd.f32 %v196, %v126
  %v209 = vadd.f32 %v197, %v128
  %v210 = vadd.f32 %v198, %v130
  %v211 = vadd.f32 %v199, %v132
  %212 = vst [vmem:[%s6] sm:$0xff] %v200
  %vm213 = vcmask 523264
  %214 = vst.msk [vmem:[%s6 + $0x8] sm:$0xff] %vm213, %v201
  %215 = vst [vmem:[%s6 + $0x10] sm:$0xff] %v202
  %216 = vst.msk [vmem:[%s6 + $0x18] sm:$0xff] %vm213, %v203
  %217 = vst [vmem:[%s6 + $0x20] sm:$0xff] %v204
  %218 = vst.msk [vmem:[%s6 + $0x28] sm:$0xff] %vm213, %v205
  %219 = vst [vmem:[%s6 + $0x30] sm:$0xff] %v206
  %220 = vst.msk [vmem:[%s6 + $0x38] sm:$0xff] %vm213, %v207
  %221 = vst [vmem:[%s6 + $0x40] sm:$0xff] %v208
  %222 = vst.msk [vmem:[%s6 + $0x48] sm:$0xff] %vm213, %v209
  %223 = vst [vmem:[%s6 + $0x50] sm:$0xff] %v210
  %224 = vst.msk [vmem:[%s6 + $0x58] sm:$0xff] %vm213, %v211
  %v225 = vmul.f32 %v140, %v170
  %v226 = vmul.f32 %v141, %v171
  %v227 = vmul.f32 %v142, %v172
  %v228 = vmul.f32 %v143, %v173
  %v229 = vmul.f32 %v144, %v174
  %v230 = vmul.f32 %v145, %v175
  %v231 = vmul.f32 %v146, %v176
  %v232 = vmul.f32 %v147, %v177
  %v233 = vmul.f32 %v148, %v178
  %v234 = vmul.f32 %v149, %v179
  %v235 = vmul.f32 %v150, %v180
  %v236 = vmul.f32 %v151, %v181
  %v237 = vsel %vm213, %v225, 0.0
  %238 = vadd.xlane.f32.xlu0 %v237
  %v239 = vpop.xlane.xlu0 %238
  %v240 = vsel %vm213, %v227, 0.0
  %241 = vadd.xlane.f32.xlu0 %v240
  %v242 = vpop.xlane.xlu0 %241
  %v243 = vsel %vm213, %v229, 0.0
  %244 = vadd.xlane.f32.xlu0 %v243
  %v245 = vpop.xlane.xlu0 %244
  %v246 = vsel %vm213, %v231, 0.0
  %247 = vadd.xlane.f32.xlu0 %v246
  %v248 = vpop.xlane.xlu0 %247
  %v249 = vsel %vm213, %v233, 0.0
  %250 = vadd.xlane.f32.xlu0 %v249
  %v251 = vpop.xlane.xlu0 %250
  %v252 = vsel %vm213, %v235, 0.0
  %253 = vadd.xlane.f32.xlu0 %v252
  %v254 = vpop.xlane.xlu0 %253
  %v255 = vmul.f32 %v239, 0.125
  %v256 = vmul.f32 %v242, 0.125
  %v257 = vmul.f32 %v245, 0.125
  %v258 = vmul.f32 %v248, 0.125
  %v259 = vmul.f32 %v251, 0.125
  %v260 = vmul.f32 %v254, 0.125
  %267 = vrot.lane.b32.xlu0 %v225, 64
  %v268 = vpop.permute.xlu0 %267
  %269 = vrot.lane.b32.xlu0 %v227, 64
  %v270 = vpop.permute.xlu0 %269
  %271 = vrot.lane.b32.xlu0 %v229, 64
  %v272 = vpop.permute.xlu0 %271
  %273 = vrot.lane.b32.xlu0 %v231, 64
  %v274 = vpop.permute.xlu0 %273
  %275 = vrot.lane.b32.xlu0 %v233, 64
  %v276 = vpop.permute.xlu0 %275
  %277 = vrot.lane.b32.xlu0 %v235, 64
  %v278 = vpop.permute.xlu0 %277
  %v285 = vsel %vm213, %v268, 0.0
  %286 = vadd.xlane.f32.xlu0 %v285
  %v287 = vpop.xlane.xlu0 %286
  %v288 = vsel %vm213, %v270, 0.0
  %289 = vadd.xlane.f32.xlu0 %v288
  %v290 = vpop.xlane.xlu0 %289
  %v291 = vsel %vm213, %v272, 0.0
  %292 = vadd.xlane.f32.xlu0 %v291
  %v293 = vpop.xlane.xlu0 %292
  %v294 = vsel %vm213, %v274, 0.0
  %295 = vadd.xlane.f32.xlu0 %v294
  %v296 = vpop.xlane.xlu0 %295
  %v297 = vsel %vm213, %v276, 0.0
  %298 = vadd.xlane.f32.xlu0 %v297
  %v299 = vpop.xlane.xlu0 %298
  %v300 = vsel %vm213, %v278, 0.0
  %301 = vadd.xlane.f32.xlu0 %v300
  %v302 = vpop.xlane.xlu0 %301
  %v303 = vmul.f32 %v287, 0.125
  %v304 = vmul.f32 %v290, 0.125
  %v305 = vmul.f32 %v293, 0.125
  %v306 = vmul.f32 %v296, 0.125
  %v307 = vmul.f32 %v299, 0.125
  %v308 = vmul.f32 %v302, 0.125
  %v309 = vsel %vm213, %v226, 0.0
  %310 = vadd.xlane.f32.xlu0 %v309
  %v311 = vpop.xlane.xlu0 %310
  %v312 = vsel %vm213, %v228, 0.0
  %313 = vadd.xlane.f32.xlu0 %v312
  %v314 = vpop.xlane.xlu0 %313
  %v315 = vsel %vm213, %v230, 0.0
  %316 = vadd.xlane.f32.xlu0 %v315
  %v317 = vpop.xlane.xlu0 %316
  %v318 = vsel %vm213, %v232, 0.0
  %319 = vadd.xlane.f32.xlu0 %v318
  %v320 = vpop.xlane.xlu0 %319
  %v321 = vsel %vm213, %v234, 0.0
  %322 = vadd.xlane.f32.xlu0 %v321
  %v323 = vpop.xlane.xlu0 %322
  %v324 = vsel %vm213, %v236, 0.0
  %325 = vadd.xlane.f32.xlu0 %v324
  %v326 = vpop.xlane.xlu0 %325
  %v327 = vmul.f32 %v311, 0.125
  %v328 = vmul.f32 %v314, 0.125
  %v329 = vmul.f32 %v317, 0.125
  %v330 = vmul.f32 %v320, 0.125
  %v331 = vmul.f32 %v323, 0.125
  %v332 = vmul.f32 %v326, 0.125
  %vm333 = vcmask 7168
  %v334 = vsel %vm333, %v255, %v303
  %v335 = vsel %vm333, %v256, %v304
  %v336 = vsel %vm333, %v257, %v305
  %v337 = vsel %vm333, %v258, %v306
  %v338 = vsel %vm333, %v259, %v307
  %v339 = vsel %vm333, %v260, %v308
  %vm340 = vcmask 15360
  %v341 = vsel %vm340, %v334, %v327
  %v342 = vsel %vm340, %v335, %v328
  %v343 = vsel %vm340, %v336, %v329
  %v344 = vsel %vm340, %v337, %v330
  %v345 = vsel %vm340, %v338, %v331
  %v346 = vsel %vm340, %v339, %v332
  %vm347 = vcmask 23552
  %348 = vst.msk [vmem:[%s5] sm:$0xff] %vm347, %v341
  %349 = vst.msk [vmem:[%s5 + $0x8] sm:$0xff] %vm347, %v342
  %350 = vst.msk [vmem:[%s5 + $0x10] sm:$0xff] %vm347, %v343
  %351 = vst.msk [vmem:[%s5 + $0x18] sm:$0xff] %vm347, %v344
  %352 = vst.msk [vmem:[%s5 + $0x20] sm:$0xff] %vm347, %v345
  %353 = vst.msk [vmem:[%s5 + $0x28] sm:$0xff] %vm347, %v346
  // Predicated region
  $region22: #{gnn_forward.20} parent=0 // pred_check
    _
  $region23: #{gnn_forward.20} parent=0 // pred_check_branch
    %355 = sbr.rel (0) target = $region25
  $region24: #{gnn_forward.20} parent=0 // pred_region
    _
  $region25: #{gnn_forward.20} parent=0 // pred_fallthru
    _
  // Predicated region
  $region26: #{gnn_forward.20} parent=0 // pred_check
    _
  $region27: #{gnn_forward.20} parent=0 // pred_check_branch
    %357 = sbr.rel (0) target = $region29
  $region28: #{gnn_forward.20} parent=0 // pred_region
    _
  $region29: #{gnn_forward.20} parent=0 // pred_fallthru
    _
  // Predicated region
  $region30: #{gnn_forward.20} parent=0 // pred_check
    _
  $region31: #{gnn_forward.20} parent=0 // pred_check_branch
    %359 = sbr.rel (0) target = $region33
  $region32: #{gnn_forward.20} parent=0 // pred_region
    _
  $region33: #{gnn_forward.20} parent=0 // pred_fallthru
    _
  // Predicated region
  $region34: #{gnn_forward.20} parent=0 // pred_check
    _
  $region35: #{gnn_forward.20} parent=0 // pred_check_branch
    %361 = sbr.rel (0) target = $region37
  $region36: #{gnn_forward.20} parent=0 // pred_region
    _
  $region37: #{gnn_forward.20} parent=0 // pred_fallthru
    _

// kernel: gnn_forward.21
$region0: #{gnn_forward.21}
  #allocation0 [shape = 'u32[]', space=smem, size = 0x4, offset = 0x4, fixed_abs, tag = 'smem constant byte address 0x4 - core index']
  #allocation1 [shape = 'u32[144,128]{1,0:T(1,128)}', space=vmem, size = 0x12000, scoped, tag = 'internal scratch']
  %s0 = inlined_call_operand.vmem [shape: f32[16,192], index: 0, kind: input, shape index: {}]
  %s1 = inlined_call_operand.vmem [shape: f32[16,192], index: 1, kind: input, shape index: {}]
  %s2 = inlined_call_operand.vmem [shape: f32[1,192], index: 2, kind: input, shape index: {}]
  %s3 = inlined_call_operand.vmem [shape: f32[1,192], index: 3, kind: input, shape index: {}]
  %s4 = inlined_call_operand.vmem [shape: f32[16,192], index: 4, kind: output, shape index: {}]
  %s5 = sld [smem:[#allocation0]]
  $region26: #{gnn_forward.21} parent=0
    _
  %s7 = ssub.s32 1, %s5
  %s8 = scalar_select 0, %s7, %s5
  // Predicated region
  $region2: #{gnn_forward.21} parent=0 // pred_check
    _
  $region3: #{gnn_forward.21} parent=0 // pred_check_branch
    %10 = sbr.rel (0) target = $region5
  $region4: #{gnn_forward.21} parent=0 // pred_region
    _
  $region5: #{gnn_forward.21} parent=0 // pred_fallthru
    _
  // Predicated region
  $region6: #{gnn_forward.21} parent=0 // pred_check
    _
  $region7: #{gnn_forward.21} parent=0 // pred_check_branch
    %12 = sbr.rel (0) target = $region9
  $region8: #{gnn_forward.21} parent=0 // pred_region
    _
  $region9: #{gnn_forward.21} parent=0 // pred_fallthru
    _
  // Predicated region
  $region10: #{gnn_forward.21} parent=0 // pred_check
    _
  $region11: #{gnn_forward.21} parent=0 // pred_check_branch
    %14 = sbr.rel (0) target = $region13
  $region12: #{gnn_forward.21} parent=0 // pred_region
    _
  $region13: #{gnn_forward.21} parent=0 // pred_fallthru
    _
  // Predicated region
  $region14: #{gnn_forward.21} parent=0 // pred_check
    _
  $region15: #{gnn_forward.21} parent=0 // pred_check_branch
    %16 = sbr.rel (0) target = $region17
  $region16: #{gnn_forward.21} parent=0 // pred_region
    _
  $region17: #{gnn_forward.21} parent=0 // pred_fallthru
    _
  %v17 = vld [vmem:[%s0] sm:$0xff]
  %v18 = vld [vmem:[%s0 + $0x8] sm:$0xff]
  %v19 = vld [vmem:[%s0 + $0x10] sm:$0xff]
  %v20 = vld [vmem:[%s0 + $0x18] sm:$0xff]
  %v21 = vld [vmem:[%s1] sm:$0xff]
  %v22 = vld [vmem:[%s1 + $0x8] sm:$0xff]
  %v23 = vld [vmem:[%s1 + $0x10] sm:$0xff]
  %v24 = vld [vmem:[%s1 + $0x18] sm:$0xff]
  %v25 = vld [vmem:[%s2] sm:$0x3]
  %v27 = vlaneseq
  %v28 = vshrl.u32 %v27, 7
  %v29 = vsub.s32 0, %v28
  %v30 = vrot.slane %v25, %v29
  %v31 = vlaneseq
  %v32 = vshrl.u32 %v31, 7
  %v33 = vsub.s32 1, %v32
  %v34 = vrot.slane %v25, %v33
  %v37 = vmul.f32 %v17, %v30
  %v38 = vmul.f32 %v18, %v34
  %v39 = vmul.f32 %v19, %v30
  %v40 = vmul.f32 %v20, %v34
  %vm41 = vcmask 523264
  %v42 = vsel %vm41, %v38, 0.0
  %v43 = vadd.f32 %v37, %v42
  %44 = vadd.xlane.f32.xlu0 %v43
  %v45 = vpop.xlane.xlu0 %44
  %v46 = vsel %vm41, %v40, 0.0
  %v47 = vadd.f32 %v39, %v46
  %48 = vadd.xlane.f32.xlu0 %v47
  %v49 = vpop.xlane.xlu0 %48
  %v50 = vld [vmem:[%s3] sm:$0x3]
  %v52 = vlaneseq
  %v53 = vshrl.u32 %v52, 7
  %v54 = vsub.s32 0, %v53
  %v55 = vrot.slane %v50, %v54
  %v56 = vlaneseq
  %v57 = vshrl.u32 %v56, 7
  %v58 = vsub.s32 1, %v57
  %v59 = vrot.slane %v50, %v58
  %v62 = vmul.f32 %v21, %v55
  %v63 = vmul.f32 %v22, %v59
  %v64 = vmul.f32 %v23, %v55
  %v65 = vmul.f32 %v24, %v59
  %v66 = vsel %vm41, %v63, 0.0
  %v67 = vadd.f32 %v62, %v66
  %68 = vadd.xlane.f32.xlu0 %v67
  %v69 = vpop.xlane.xlu0 %68
  %v70 = vsel %vm41, %v65, 0.0
  %v71 = vadd.f32 %v64, %v70
  %72 = vadd.xlane.f32.xlu0 %v71
  %v73 = vpop.xlane.xlu0 %72
  %v74 = vadd.f32 %v45, %v69
  %v75 = vadd.f32 %v49, %v73
  %v76 = vxor.u32 %v74, 2147483648
  %v77 = vxor.u32 %v75, 2147483648
  %v78 = vmul.f32 %v76, 1.442695
  %v79 = vpow.pop %v78
  %v80 = vmul.f32 %v77, 1.442695
  %v81 = vpow.pop %v80
  %v82 = vadd.f32 %v79, 1.0
  %v83 = vadd.f32 %v81, 1.0
  %v84 = vrcp.pop %v82
  %v85 = vmul.f32 1.0, %v84
  %v86 = vrcp.pop %v83
  %v87 = vmul.f32 1.0, %v86
  %v88 = vmul.f32 %v85, %v21
  %v89 = vmul.f32 %v85, %v22
  %v90 = vmul.f32 %v87, %v23
  %v91 = vmul.f32 %v87, %v24
  %v92 = vsub.f32 1.0, %v85
  %v93 = vsub.f32 1.0, %v87
  %v94 = vmul.f32 %v92, %v17
  %v95 = vmul.f32 %v92, %v18
  %v96 = vmul.f32 %v93, %v19
  %v97 = vmul.f32 %v93, %v20
  %v98 = vadd.f32 %v88, %v94
  %v99 = vadd.f32 %v89, %v95
  %v100 = vadd.f32 %v90, %v96
  %v101 = vadd.f32 %v91, %v97
  %102 = vst [vmem:[%s4] sm:$0xff] %v98
  %103 = vst.msk [vmem:[%s4 + $0x8] sm:$0xff] %vm41, %v99
  %104 = vst [vmem:[%s4 + $0x10] sm:$0xff] %v100
  %105 = vst.msk [vmem:[%s4 + $0x18] sm:$0xff] %vm41, %v101
  // Predicated region
  $region18: #{gnn_forward.21} parent=0 // pred_check
    _
  $region19: #{gnn_forward.21} parent=0 // pred_check_branch
    %107 = sbr.rel (0) target = $region21
  $region20: #{gnn_forward.21} parent=0 // pred_region
    _
  $region21: #{gnn_forward.21} parent=0 // pred_fallthru
    _
  // Predicated region
  $region22: #{gnn_forward.21} parent=0 // pred_check
    _
  $region23: #{gnn_forward.21} parent=0 // pred_check_branch
    %109 = sbr.rel (0) target = $region25
  $region24: #{gnn_forward.21} parent=0 // pred_region
    _
  $region25: #{gnn_forward.21} parent=0 // pred_fallthru
    _

// kernel: gnn_forward.22
$region0: #{gnn_forward.22}
  #allocation0 [shape = 'u32[]', space=smem, size = 0x4, offset = 0x4, fixed_abs, tag = 'smem constant byte address 0x4 - core index']
  #allocation1 [shape = 'u32[144,128]{1,0:T(1,128)}', space=vmem, size = 0x12000, scoped, tag = 'internal scratch']
  %s0 = inlined_call_operand.vmem [shape: bf16[16,192], index: 0, kind: input, shape index: {}]
  %s1 = inlined_call_operand.vmem [shape: bf16[192,64], index: 1, kind: input, shape index: {}]
  %s2 = inlined_call_operand.vmem [shape: f32[1,64], index: 2, kind: input, shape index: {}]
  %s3 = inlined_call_operand.vmem [shape: f32[1,64], index: 3, kind: input, shape index: {}]
  %s4 = inlined_call_operand.vmem [shape: f32[1,64], index: 4, kind: input, shape index: {}]
  %s5 = inlined_call_operand.vmem [shape: f32[16,64], index: 5, kind: output, shape index: {}]
  %s6 = sld [smem:[#allocation0]]
  $region30: #{gnn_forward.22} parent=0
    _
  %s8 = ssub.s32 1, %s6
  %s9 = scalar_select 0, %s8, %s6
  // Predicated region
  $region2: #{gnn_forward.22} parent=0 // pred_check
    _
  $region3: #{gnn_forward.22} parent=0 // pred_check_branch
    %11 = sbr.rel (0) target = $region5
  $region4: #{gnn_forward.22} parent=0 // pred_region
    _
  $region5: #{gnn_forward.22} parent=0 // pred_fallthru
    _
  // Predicated region
  $region6: #{gnn_forward.22} parent=0 // pred_check
    _
  $region7: #{gnn_forward.22} parent=0 // pred_check_branch
    %13 = sbr.rel (0) target = $region9
  $region8: #{gnn_forward.22} parent=0 // pred_region
    _
  $region9: #{gnn_forward.22} parent=0 // pred_fallthru
    _
  // Predicated region
  $region10: #{gnn_forward.22} parent=0 // pred_check
    _
  $region11: #{gnn_forward.22} parent=0 // pred_check_branch
    %15 = sbr.rel (0) target = $region13
  $region12: #{gnn_forward.22} parent=0 // pred_region
    _
  $region13: #{gnn_forward.22} parent=0 // pred_fallthru
    _
  // Predicated region
  $region14: #{gnn_forward.22} parent=0 // pred_check
    _
  $region15: #{gnn_forward.22} parent=0 // pred_check_branch
    %17 = sbr.rel (0) target = $region17
  $region16: #{gnn_forward.22} parent=0 // pred_region
    _
  $region17: #{gnn_forward.22} parent=0 // pred_fallthru
    _
  // Predicated region
  $region18: #{gnn_forward.22} parent=0 // pred_check
    _
  $region19: #{gnn_forward.22} parent=0 // pred_check_branch
    %19 = sbr.rel (0) target = $region21
  $region20: #{gnn_forward.22} parent=0 // pred_region
    _
  $region21: #{gnn_forward.22} parent=0 // pred_fallthru
    _
  %v21 = vld [vmem:[%s0] sm:$0xff]
  %v22 = vld [vmem:[%s0 + $0x8] sm:$0xff]
  %v23 = vld [vmem:[%s1] sm:$0xf]
  %v24 = vld [vmem:[%s1 + $0x4] sm:$0xf]
  %v25 = vld [vmem:[%s1 + $0x8] sm:$0xf]
  %v26 = vld [vmem:[%s1 + $0xc] sm:$0xf]
  %v27 = vld [vmem:[%s1 + $0x10] sm:$0xf]
  %v28 = vld [vmem:[%s1 + $0x14] sm:$0xf]
  %v29 = vld [vmem:[%s1 + $0x18] sm:$0xf]
  %v30 = vld [vmem:[%s1 + $0x1c] sm:$0xf]
  %v31 = vld [vmem:[%s1 + $0x20] sm:$0xf]
  %v32 = vld [vmem:[%s1 + $0x24] sm:$0xf]
  %v33 = vld [vmem:[%s1 + $0x28] sm:$0xf]
  %v34 = vld [vmem:[%s1 + $0x2c] sm:$0xf]
  %v35 = vld [vmem:[%s1 + $0x30] sm:$0xf]
  %v36 = vld [vmem:[%s1 + $0x34] sm:$0xf]
  %v37 = vld [vmem:[%s1 + $0x38] sm:$0xf]
  %v38 = vld [vmem:[%s1 + $0x3c] sm:$0xf]
  %v39 = vld [vmem:[%s1 + $0x40] sm:$0xf]
  %v40 = vld [vmem:[%s1 + $0x44] sm:$0xf]
  %v41 = vld [vmem:[%s1 + $0x48] sm:$0xf]
  %v42 = vld [vmem:[%s1 + $0x4c] sm:$0xf]
  %v43 = vld [vmem:[%s1 + $0x50] sm:$0xf]
  %v44 = vld [vmem:[%s1 + $0x54] sm:$0xf]
  %v45 = vld [vmem:[%s1 + $0x58] sm:$0xf]
  %v46 = vld [vmem:[%s1 + $0x5c] sm:$0xf]
  %v47 = vld [vmem:[%s2] sm:$0x1]
  %v49 = vlaneseq
  %v50 = vshrl.u32 %v49, 7
  %v51 = vsub.s32 0, %v50
  %v52 = vrot.slane %v47, %v51
  %v56 = vunpack.c.l.b16 %v21
  %v57 = vunpack.c.h.b16 %v21
  %v58 = vunpack.c.l.b16 %v22
  %v59 = vunpack.c.h.b16 %v22
  %v60 = vpack.c.b16 %v58, %v56
  %v61 = vpack.c.b16 %v59, %v57
  %v87 = vunpack.c.l.b16 %v23
  %v88 = vunpack.c.l.b16 %v24
  %v89 = vunpack.c.l.b16 %v25
  %v90 = vunpack.c.l.b16 %v26
  %v91 = vunpack.c.l.b16 %v27
  %v92 = vunpack.c.l.b16 %v28
  %v93 = vunpack.c.l.b16 %v29
  %v94 = vunpack.c.l.b16 %v30
  %v95 = vunpack.c.l.b16 %v31
  %v96 = vunpack.c.l.b16 %v32
  %v97 = vunpack.c.l.b16 %v33
  %v98 = vunpack.c.l.b16 %v34
  %v99 = vunpack.c.l.b16 %v35
  %v100 = vunpack.c.l.b16 %v36
  %v101 = vunpack.c.l.b16 %v37
  %v102 = vunpack.c.l.b16 %v38
  %v103 = vunpack.c.l.b16 %v39
  %v104 = vunpack.c.l.b16 %v40
  %v105 = vunpack.c.l.b16 %v41
  %v106 = vunpack.c.l.b16 %v42
  %v107 = vunpack.c.l.b16 %v43
  %v108 = vunpack.c.l.b16 %v44
  %v109 = vunpack.c.l.b16 %v45
  %v110 = vunpack.c.l.b16 %v46
  %v111 = vpack.c.b16 %v88, %v87
  %v112 = vpack.c.b16 %v90, %v89
  %v113 = vpack.c.b16 %v92, %v91
  %v114 = vpack.c.b16 %v94, %v93
  %v115 = vpack.c.b16 %v96, %v95
  %v116 = vpack.c.b16 %v98, %v97
  %v117 = vpack.c.b16 %v100, %v99
  %v118 = vpack.c.b16 %v102, %v101
  %v119 = vpack.c.b16 %v104, %v103
  %v120 = vpack.c.b16 %v106, %v105
  %v121 = vpack.c.b16 %v108, %v107
  %v122 = vpack.c.b16 %v110, %v109
  %vm135 = vcmask 523264
  %v137 = vsel %vm135, %v61, 0
  %139 = vmatprep.subr.bf16.mxu0 0
  %140 = vmatpush1.bf16.msra.mxu0 %v111
  %141 = vmatprep.subr.bf16.mxu0 0
  %142 = vmatpush1.bf16.msra.mxu0 %v112
  %143 = vmatprep.subr.bf16.mxu0 0
  %144 = vmatpush1.bf16.msra.mxu0 %v113
  %145 = vmatprep.subr.bf16.mxu0 0
  %146 = vmatpush1.bf16.msra.mxu0 %v114
  %147 = vmatprep.subr.bf16.mxu0 0
  %148 = vmatpush1.bf16.msra.mxu0 %v115
  %149 = vmatprep.subr.bf16.mxu0 0
  %150 = vmatpush1.bf16.msra.mxu0 %v116
  %151 = vmatprep.subr.bf16.mxu0 0
  %152 = vmatpush1.bf16.msra.mxu0 %v117
  %153 = vmatprep.subr.bf16.mxu0 0
  %154 = vmatpush1.bf16.msra.mxu0 %v118
  %155 = vmatprep.subr.bf16.mxu0 0
  %156 = vmatpush1.bf16.msra.mxu0 %v119
  %157 = vmatprep.subr.bf16.mxu0 0
  %158 = vmatpush1.bf16.msra.mxu0 %v120
  %159 = vmatprep.subr.bf16.mxu0 0
  %160 = vmatpush1.bf16.msra.mxu0 %v121
  %161 = vmatprep.subr.bf16.mxu0 0
  %162 = vmatpush1.bf16.msra.mxu0 %v122
  %163 = vmatprep.subr.bf16.mxu0 0
  %164 = vmatpush1.bf16.msra.mxu0 0
  %165 = vmatprep.subr.bf16.mxu0 0
  %166 = vmatpush1.bf16.msra.mxu0 0
  %167 = vmatprep.subr.bf16.mxu0 0
  %168 = vmatpush1.bf16.msra.mxu0 0
  %169 = vmatprep.subr.bf16.mxu0 0
  %170 = vmatpush1.bf16.msra.mxu0 0
  %171 = vmatprep.mubr.bf16.mxu0 %v137
  %172 = vmatmul.mubr.bf16.gmra.mrb[0].mxu0 %v60
  %v173 = vpop.f32.mrb[0].mxu0
  %v174 = vadd.f32 %v52, %v173
  %v175 = vpop.f32.mrb[0].mxu0
  %v176 = vpop.f32.mrb[0].mxu0
  %v177 = vadd.f32 %v52, %v176
  %v178 = vpop.f32.mrb[0].mxu0
  %179 = vdwg.mxu0
  %v180 = vmax.f32 %v174, 0.0
  %v181 = vmax.f32 %v177, 0.0
  %v182 = vld [vmem:[%s3] sm:$0x1]
  %v184 = vlaneseq
  %v185 = vshrl.u32 %v184, 7
  %v186 = vsub.s32 0, %v185
  %v187 = vrot.slane %v182, %v186
  %v189 = vmul.f32 %v180, %v187
  %v190 = vmul.f32 %v181, %v187
  %v191 = vld [vmem:[%s4] sm:$0x1]
  %v193 = vlaneseq
  %v194 = vshrl.u32 %v193, 7
  %v195 = vsub.s32 0, %v194
  %v196 = vrot.slane %v191, %v195
  %v198 = vadd.f32 %v189, %v196
  %v199 = vadd.f32 %v190, %v196
  %200 = vst.msk [vmem:[%s5] sm:$0xff] %vm135, %v198
  %201 = vst.msk [vmem:[%s5 + $0x8] sm:$0xff] %vm135, %v199
  // Predicated region
  $region22: #{gnn_forward.22} parent=0 // pred_check
    _
  $region23: #{gnn_forward.22} parent=0 // pred_check_branch
    %203 = sbr.rel (0) target = $region25
  $region24: #{gnn_forward.22} parent=0 // pred_region
    _
  $region25: #{gnn_forward.22} parent=0 // pred_fallthru
    _
  // Predicated region
  $region26: #{gnn_forward.22} parent=0 // pred_check
    _
  $region27: #{gnn_forward.22} parent=0 // pred_check_branch
    %205 = sbr.rel (0) target = $region29
  $region28: #{gnn_forward.22} parent=0 // pred_region
    _
  $region29: #{gnn_forward.22} parent=0 // pred_fallthru
    _

// kernel: gnn_forward.23
$region0: #{gnn_forward.23}
  #allocation0 [shape = 'u32[]', space=smem, size = 0x4, offset = 0x4, fixed_abs, tag = 'smem constant byte address 0x4 - core index']
  #allocation1 [shape = 'u32[144,128]{1,0:T(1,128)}', space=vmem, size = 0x12000, scoped, tag = 'internal scratch']
  %s0 = inlined_call_operand.vmem [shape: bf16[16,64], index: 0, kind: input, shape index: {}]
  %s1 = inlined_call_operand.vmem [shape: bf16[64,576], index: 1, kind: input, shape index: {}]
  %s2 = inlined_call_operand.vmem [shape: f32[1,576], index: 2, kind: input, shape index: {}]
  %s3 = inlined_call_operand.vmem [shape: bf16[64,192], index: 3, kind: input, shape index: {}]
  %s4 = inlined_call_operand.vmem [shape: f32[1,192], index: 4, kind: input, shape index: {}]
  %s5 = inlined_call_operand.vmem [shape: bf16[16,576], index: 5, kind: output, shape index: {0}]
  %s6 = inlined_call_operand.vmem [shape: f32[16,192], index: 6, kind: output, shape index: {1}]
  %7 = xla_tuple %s5, %s6
  %s8 = sld [smem:[#allocation0]]
  $region38: #{gnn_forward.23} parent=0
    _
  %s10 = ssub.s32 1, %s8
  %s11 = scalar_select 0, %s10, %s8
  // Predicated region
  $region2: #{gnn_forward.23} parent=0 // pred_check
    _
  $region3: #{gnn_forward.23} parent=0 // pred_check_branch
    %13 = sbr.rel (0) target = $region5
  $region4: #{gnn_forward.23} parent=0 // pred_region
    _
  $region5: #{gnn_forward.23} parent=0 // pred_fallthru
    _
  // Predicated region
  $region6: #{gnn_forward.23} parent=0 // pred_check
    _
  $region7: #{gnn_forward.23} parent=0 // pred_check_branch
    %15 = sbr.rel (0) target = $region9
  $region8: #{gnn_forward.23} parent=0 // pred_region
    _
  $region9: #{gnn_forward.23} parent=0 // pred_fallthru
    _
  // Predicated region
  $region10: #{gnn_forward.23} parent=0 // pred_check
    _
  $region11: #{gnn_forward.23} parent=0 // pred_check_branch
    %17 = sbr.rel (0) target = $region13
  $region12: #{gnn_forward.23} parent=0 // pred_region
    _
  $region13: #{gnn_forward.23} parent=0 // pred_fallthru
    _
  // Predicated region
  $region14: #{gnn_forward.23} parent=0 // pred_check
    _
  $region15: #{gnn_forward.23} parent=0 // pred_check_branch
    %19 = sbr.rel (0) target = $region17
  $region16: #{gnn_forward.23} parent=0 // pred_region
    _
  $region17: #{gnn_forward.23} parent=0 // pred_fallthru
    _
  // Predicated region
  $region18: #{gnn_forward.23} parent=0 // pred_check
    _
  $region19: #{gnn_forward.23} parent=0 // pred_check_branch
    %21 = sbr.rel (0) target = $region21
  $region20: #{gnn_forward.23} parent=0 // pred_region
    _
  $region21: #{gnn_forward.23} parent=0 // pred_fallthru
    _
  %v23 = vld [vmem:[%s0] sm:$0xf]
  %v24 = vld [vmem:[%s0 + $0x4] sm:$0xf]
  %v25 = vld [vmem:[%s1] sm:$0xff]
  %v26 = vld [vmem:[%s1 + $0x8] sm:$0xff]
  %v27 = vld [vmem:[%s1 + $0x10] sm:$0xf]
  %v28 = vld [vmem:[%s1 + $0x14] sm:$0xff]
  %v29 = vld [vmem:[%s1 + $0x1c] sm:$0xff]
  %v30 = vld [vmem:[%s1 + $0x24] sm:$0xf]
  %v31 = vld [vmem:[%s1 + $0x28] sm:$0xff]
  %v32 = vld [vmem:[%s1 + $0x30] sm:$0xff]
  %v33 = vld [vmem:[%s1 + $0x38] sm:$0xf]
  %v34 = vld [vmem:[%s1 + $0x3c] sm:$0xff]
  %v35 = vld [vmem:[%s1 + $0x44] sm:$0xff]
  %v36 = vld [vmem:[%s1 + $0x4c] sm:$0xf]
  %v37 = vld [vmem:[%s1 + $0x50] sm:$0xff]
  %v38 = vld [vmem:[%s1 + $0x58] sm:$0xff]
  %v39 = vld [vmem:[%s1 + $0x60] sm:$0xf]
  %v40 = vld [vmem:[%s1 + $0x64] sm:$0xff]
  %v41 = vld [vmem:[%s1 + $0x6c] sm:$0xff]
  %v42 = vld [vmem:[%s1 + $0x74] sm:$0xf]
  %v43 = vld [vmem:[%s1 + $0x78] sm:$0xff]
  %v44 = vld [vmem:[%s1 + $0x80] sm:$0xff]
  %v45 = vld [vmem:[%s1 + $0x88] sm:$0xf]
  %v46 = vld [vmem:[%s1 + $0x8c] sm:$0xff]
  %v47 = vld [vmem:[%s1 + $0x94] sm:$0xff]
  %v48 = vld [vmem:[%s1 + $0x9c] sm:$0xf]
  %v49 = vld [vmem:[%s2] sm:$0x1f]
  %v51 = vlaneseq
  %v52 = vshrl.u32 %v51, 7
  %v53 = vsub.s32 0, %v52
  %v54 = vrot.slane %v49, %v53
  %v55 = vlaneseq
  %v56 = vshrl.u32 %v55, 7
  %v57 = vsub.s32 1, %v56
  %v58 = vrot.slane %v49, %v57
  %v59 = vlaneseq
  %v60 = vshrl.u32 %v59, 7
  %v61 = vsub.s32 2, %v60
  %v62 = vrot.slane %v49, %v61
  %v63 = vlaneseq
  %v64 = vshrl.u32 %v63, 7
  %v65 = vsub.s32 3, %v64
  %v66 = vrot.slane %v49, %v65
  %v67 = vlaneseq
  %v68 = vshrl.u32 %v67, 7
  %v69 = vsub.s32 4, %v68
  %v70 = vrot.slane %v49, %v69
  %v78 = vunpack.c.l.b16 %v23
  %v79 = vunpack.c.l.b16 %v24
  %v80 = vpack.c.b16 %v79, %v78
  %v105 = vunpack.c.l.b16 %v25
  %v106 = vunpack.c.h.b16 %v25
  %v107 = vunpack.c.l.b16 %v26
  %v108 = vunpack.c.h.b16 %v26
  %v109 = vunpack.c.l.b16 %v27
  %v110 = vunpack.c.l.b16 %v28
  %v111 = vunpack.c.h.b16 %v28
  %v112 = vunpack.c.l.b16 %v29
  %v113 = vunpack.c.h.b16 %v29
  %v114 = vunpack.c.l.b16 %v30
  %v115 = vunpack.c.l.b16 %v31
  %v116 = vunpack.c.h.b16 %v31
  %v117 = vunpack.c.l.b16 %v32
  %v118 = vunpack.c.h.b16 %v32
  %v119 = vunpack.c.l.b16 %v33
  %v120 = vunpack.c.l.b16 %v34
  %v121 = vunpack.c.h.b16 %v34
  %v122 = vunpack.c.l.b16 %v35
  %v123 = vunpack.c.h.b16 %v35
  %v124 = vunpack.c.l.b16 %v36
  %v125 = vunpack.c.l.b16 %v37
  %v126 = vunpack.c.h.b16 %v37
  %v127 = vunpack.c.l.b16 %v38
  %v128 = vunpack.c.h.b16 %v38
  %v129 = vunpack.c.l.b16 %v39
  %v130 = vunpack.c.l.b16 %v40
  %v131 = vunpack.c.h.b16 %v40
  %v132 = vunpack.c.l.b16 %v41
  %v133 = vunpack.c.h.b16 %v41
  %v134 = vunpack.c.l.b16 %v42
  %v135 = vunpack.c.l.b16 %v43
  %v136 = vunpack.c.h.b16 %v43
  %v137 = vunpack.c.l.b16 %v44
  %v138 = vunpack.c.h.b16 %v44
  %v139 = vunpack.c.l.b16 %v45
  %v140 = vunpack.c.l.b16 %v46
  %v141 = vunpack.c.h.b16 %v46
  %v142 = vunpack.c.l.b16 %v47
  %v143 = vunpack.c.h.b16 %v47
  %v144 = vunpack.c.l.b16 %v48
  %v145 = vpack.c.b16 %v110, %v105
  %v146 = vpack.c.b16 %v111, %v106
  %v147 = vpack.c.b16 %v112, %v107
  %v148 = vpack.c.b16 %v113, %v108
  %v149 = vpack.c.b16 %v114, %v109
  %v150 = vpack.c.b16 %v120, %v115
  %v151 = vpack.c.b16 %v121, %v116
  %v152 = vpack.c.b16 %v122, %v117
  %v153 = vpack.c.b16 %v123, %v118
  %v154 = vpack.c.b16 %v124, %v119
  %v155 = vpack.c.b16 %v130, %v125
  %v156 = vpack.c.b16 %v131, %v126
  %v157 = vpack.c.b16 %v132, %v127
  %v158 = vpack.c.b16 %v133, %v128
  %v159 = vpack.c.b16 %v134, %v129
  %v160 = vpack.c.b16 %v140, %v135
  %v161 = vpack.c.b16 %v141, %v136
  %v162 = vpack.c.b16 %v142, %v137
  %v163 = vpack.c.b16 %v143, %v138
  %v164 = vpack.c.b16 %v144, %v139
  %vm185 = vcmask 523264
  %v187 = vsel %vm185, %v80, 0
  %189 = vmatprep.subr.bf16.mxu0 %v146
  %190 = vmatpush1.bf16.msra.mxu0 %v145
  %191 = vmatprep.subr.bf16.mxu0 %v151
  %192 = vmatpush1.bf16.msra.mxu0 %v150
  %193 = vmatprep.subr.bf16.mxu0 %v156
  %194 = vmatpush1.bf16.msra.mxu0 %v155
  %195 = vmatprep.subr.bf16.mxu0 %v161
  %196 = vmatpush1.bf16.msra.mxu0 %v160
  %197 = vmatprep.subr.bf16.mxu0 0
  %198 = vmatpush1.bf16.msra.mxu0 0
  %199 = vmatprep.subr.bf16.mxu0 0
  %200 = vmatpush1.bf16.msra.mxu0 0
  %201 = vmatprep.subr.bf16.mxu0 0
  %202 = vmatpush1.bf16.msra.mxu0 0
  %203 = vmatprep.subr.bf16.mxu0 0
  %204 = vmatpush1.bf16.msra.mxu0 0
  %205 = vmatprep.subr.bf16.mxu0 0
  %206 = vmatpush1.bf16.msra.mxu0 0
  %207 = vmatprep.subr.bf16.mxu0 0
  %208 = vmatpush1.bf16.msra.mxu0 0
  %209 = vmatprep.subr.bf16.mxu0 0
  %210 = vmatpush1.bf16.msra.mxu0 0
  %211 = vmatprep.subr.bf16.mxu0 0
  %212 = vmatpush1.bf16.msra.mxu0 0
  %213 = vmatprep.subr.bf16.mxu0 0
  %214 = vmatpush1.bf16.msra.mxu0 0
  %215 = vmatprep.subr.bf16.mxu0 0
  %216 = vmatpush1.bf16.msra.mxu0 0
  %217 = vmatprep.subr.bf16.mxu0 0
  %218 = vmatpush1.bf16.msra.mxu0 0
  %219 = vmatprep.subr.bf16.mxu0 0
  %220 = vmatpush1.bf16.msra.mxu0 0
  %221 = vmatprep.mubr.bf16.mxu0 0
  %222 = vmatmul.mubr.bf16.gmra.mrb[0].mxu0 %v187
  %v223 = vpop.f32.mrb[0].mxu0
  %v224 = vadd.f32 %v54, %v223
  %v225 = vpop.f32.mrb[0].mxu0
  %v226 = vadd.f32 %v58, %v225
  %v227 = vpop.f32.mrb[0].mxu0
  %v228 = vadd.f32 %v54, %v227
  %v229 = vpop.f32.mrb[0].mxu0
  %v230 = vadd.f32 %v58, %v229
  %231 = vdwg.mxu0
  %232 = vmatprep.subr.bf16.mxu0 %v148
  %233 = vmatpush1.bf16.msra.mxu0 %v147
  %234 = vmatprep.subr.bf16.mxu0 %v153
  %235 = vmatpush1.bf16.msra.mxu0 %v152
  %236 = vmatprep.subr.bf16.mxu0 %v158
  %237 = vmatpush1.bf16.msra.mxu0 %v157
  %238 = vmatprep.subr.bf16.mxu0 %v163
  %239 = vmatpush1.bf16.msra.mxu0 %v162
  %240 = vmatprep.subr.bf16.mxu0 0
  %241 = vmatpush1.bf16.msra.mxu0 0
  %242 = vmatprep.subr.bf16.mxu0 0
  %243 = vmatpush1.bf16.msra.mxu0 0
  %244 = vmatprep.subr.bf16.mxu0 0
  %245 = vmatpush1.bf16.msra.mxu0 0
  %246 = vmatprep.subr.bf16.mxu0 0
  %247 = vmatpush1.bf16.msra.mxu0 0
  %248 = vmatprep.subr.bf16.mxu0 0
  %249 = vmatpush1.bf16.msra.mxu0 0
  %250 = vmatprep.subr.bf16.mxu0 0
  %251 = vmatpush1.bf16.msra.mxu0 0
  %252 = vmatprep.subr.bf16.mxu0 0
  %253 = vmatpush1.bf16.msra.mxu0 0
  %254 = vmatprep.subr.bf16.mxu0 0
  %255 = vmatpush1.bf16.msra.mxu0 0
  %256 = vmatprep.subr.bf16.mxu0 0
  %257 = vmatpush1.bf16.msra.mxu0 0
  %258 = vmatprep.subr.bf16.mxu0 0
  %259 = vmatpush1.bf16.msra.mxu0 0
  %260 = vmatprep.subr.bf16.mxu0 0
  %261 = vmatpush1.bf16.msra.mxu0 0
  %262 = vmatprep.subr.bf16.mxu0 0
  %263 = vmatpush1.bf16.msra.mxu0 0
  %264 = vmatprep.mubr.bf16.mxu0 0
  %265 = vmatmul.mubr.bf16.gmra.mrb[0].mxu0 %v187
  %v266 = vpop.f32.mrb[0].mxu0
  %v267 = vadd.f32 %v62, %v266
  %v268 = vpop.f32.mrb[0].mxu0
  %v269 = vadd.f32 %v66, %v268
  %v270 = vpop.f32.mrb[0].mxu0
  %v271 = vadd.f32 %v62, %v270
  %v272 = vpop.f32.mrb[0].mxu0
  %v273 = vadd.f32 %v66, %v272
  %274 = vdwg.mxu0
  %275 = vmatprep.subr.bf16.mxu0 0
  %276 = vmatpush1.bf16.msra.mxu0 %v149
  %277 = vmatprep.subr.bf16.mxu0 0
  %278 = vmatpush1.bf16.msra.mxu0 %v154
  %279 = vmatprep.subr.bf16.mxu0 0
  %280 = vmatpush1.bf16.msra.mxu0 %v159
  %281 = vmatprep.subr.bf16.mxu0 0
  %282 = vmatpush1.bf16.msra.mxu0 %v164
  %283 = vmatprep.subr.bf16.mxu0 0
  %284 = vmatpush1.bf16.msra.mxu0 0
  %285 = vmatprep.subr.bf16.mxu0 0
  %286 = vmatpush1.bf16.msra.mxu0 0
  %287 = vmatprep.subr.bf16.mxu0 0
  %288 = vmatpush1.bf16.msra.mxu0 0
  %289 = vmatprep.subr.bf16.mxu0 0
  %290 = vmatpush1.bf16.msra.mxu0 0
  %291 = vmatprep.subr.bf16.mxu0 0
  %292 = vmatpush1.bf16.msra.mxu0 0
  %293 = vmatprep.subr.bf16.mxu0 0
  %294 = vmatpush1.bf16.msra.mxu0 0
  %295 = vmatprep.subr.bf16.mxu0 0
  %296 = vmatpush1.bf16.msra.mxu0 0
  %297 = vmatprep.subr.bf16.mxu0 0
  %298 = vmatpush1.bf16.msra.mxu0 0
  %299 = vmatprep.subr.bf16.mxu0 0
  %300 = vmatpush1.bf16.msra.mxu0 0
  %301 = vmatprep.subr.bf16.mxu0 0
  %302 = vmatpush1.bf16.msra.mxu0 0
  %303 = vmatprep.subr.bf16.mxu0 0
  %304 = vmatpush1.bf16.msra.mxu0 0
  %305 = vmatprep.subr.bf16.mxu0 0
  %306 = vmatpush1.bf16.msra.mxu0 0
  %307 = vmatprep.mubr.bf16.mxu0 0
  %308 = vmatmul.mubr.bf16.gmra.mrb[0].mxu0 %v187
  %v309 = vpop.f32.mrb[0].mxu0
  %v310 = vadd.f32 %v70, %v309
  %v311 = vpop.f32.mrb[0].mxu0
  %v312 = vpop.f32.mrb[0].mxu0
  %v313 = vadd.f32 %v70, %v312
  %v314 = vpop.f32.mrb[0].mxu0
  %315 = vdwg.mxu0
  %v316 = vpack.c.bf16 %v228, %v224
  %v317 = vpack.c.bf16 %v230, %v226
  %v318 = vpack.c.bf16 %v271, %v267
  %v319 = vpack.c.bf16 %v273, %v269
  %v320 = vpack.c.bf16 %v313, %v310
  %v326 = vunpack.c.l.b16 %v316
  %v327 = vunpack.c.l.b16 %v317
  %v328 = vunpack.c.l.b16 %v318
  %v329 = vunpack.c.l.b16 %v319
  %v330 = vunpack.c.l.b16 %v320
  %v331 = vunpack.c.h.b16 %v316
  %v332 = vunpack.c.h.b16 %v317
  %v333 = vunpack.c.h.b16 %v318
  %v334 = vunpack.c.h.b16 %v319
  %v335 = vunpack.c.h.b16 %v320
  %v336 = vpack.c.b16 %v327, %v326
  %v337 = vpack.c.b16 %v329, %v328
  %v338 = vpack.c.b16 %v330, %v330
  %v339 = vpack.c.b16 %v332, %v331
  %v340 = vpack.c.b16 %v334, %v333
  %v341 = vpack.c.b16 %v335, %v335
  %348 = vst [vmem:[%s5] sm:$0xff] %v336
  %349 = vst [vmem:[%s5 + $0x8] sm:$0xff] %v337
  %vm350 = vcmask 519168
  %351 = vst.msk [vmem:[%s5 + $0x10] sm:$0xf] %vm350, %v338
  %352 = vst [vmem:[%s5 + $0x14] sm:$0xff] %v339
  %353 = vst [vmem:[%s5 + $0x1c] sm:$0xff] %v340
  %354 = vst.msk [vmem:[%s5 + $0x24] sm:$0xf] %vm350, %v341
  %v355 = vld [vmem:[%s3] sm:$0xff]
  %v356 = vld [vmem:[%s3 + $0x8] sm:$0xff]
  %v357 = vld [vmem:[%s3 + $0x10] sm:$0xff]
  %v358 = vld [vmem:[%s3 + $0x18] sm:$0xff]
  %v359 = vld [vmem:[%s3 + $0x20] sm:$0xff]
  %v360 = vld [vmem:[%s3 + $0x28] sm:$0xff]
  %v361 = vld [vmem:[%s3 + $0x30] sm:$0xff]
  %v362 = vld [vmem:[%s3 + $0x38] sm:$0xff]
  %v363 = vld [vmem:[%s4] sm:$0x3]
  %v365 = vlaneseq
  %v366 = vshrl.u32 %v365, 7
  %v367 = vsub.s32 0, %v366
  %v368 = vrot.slane %v363, %v367
  %v369 = vlaneseq
  %v370 = vshrl.u32 %v369, 7
  %v371 = vsub.s32 1, %v370
  %v372 = vrot.slane %v363, %v371
  %v383 = vunpack.c.l.b16 %v355
  %v384 = vunpack.c.h.b16 %v355
  %v385 = vunpack.c.l.b16 %v356
  %v386 = vunpack.c.h.b16 %v356
  %v387 = vunpack.c.l.b16 %v357
  %v388 = vunpack.c.h.b16 %v357
  %v389 = vunpack.c.l.b16 %v358
  %v390 = vunpack.c.h.b16 %v358
  %v391 = vunpack.c.l.b16 %v359
  %v392 = vunpack.c.h.b16 %v359
  %v393 = vunpack.c.l.b16 %v360
  %v394 = vunpack.c.h.b16 %v360
  %v395 = vunpack.c.l.b16 %v361
  %v396 = vunpack.c.h.b16 %v361
  %v397 = vunpack.c.l.b16 %v362
  %v398 = vunpack.c.h.b16 %v362
  %v399 = vpack.c.b16 %v385, %v383
  %v400 = vpack.c.b16 %v386, %v384
  %v401 = vpack.c.b16 %v389, %v387
  %v402 = vpack.c.b16 %v390, %v388
  %v403 = vpack.c.b16 %v393, %v391
  %v404 = vpack.c.b16 %v394, %v392
  %v405 = vpack.c.b16 %v397, %v395
  %v406 = vpack.c.b16 %v398, %v396
  %415 = vmatprep.subr.bf16.mxu0 %v400
  %416 = vmatpush1.bf16.msra.mxu0 %v399
  %417 = vmatprep.subr.bf16.mxu0 %v402
  %418 = vmatpush1.bf16.msra.mxu0 %v401
  %419 = vmatprep.subr.bf16.mxu0 %v404
  %420 = vmatpush1.bf16.msra.mxu0 %v403
  %421 = vmatprep.subr.bf16.mxu0 %v406
  %422 = vmatpush1.bf16.msra.mxu0 %v405
  %423 = vmatprep.subr.bf16.mxu0 0
  %424 = vmatpush1.bf16.msra.mxu0 0
  %425 = vmatprep.subr.bf16.mxu0 0
  %426 = vmatpush1.bf16.msra.mxu0 0
  %427 = vmatprep.subr.bf16.mxu0 0
  %428 = vmatpush1.bf16.msra.mxu0 0
  %429 = vmatprep.subr.bf16.mxu0 0
  %430 = vmatpush1.bf16.msra.mxu0 0
  %431 = vmatprep.subr.bf16.mxu0 0
  %432 = vmatpush1.bf16.msra.mxu0 0
  %433 = vmatprep.subr.bf16.mxu0 0
  %434 = vmatpush1.bf16.msra.mxu0 0
  %435 = vmatprep.subr.bf16.mxu0 0
  %436 = vmatpush1.bf16.msra.mxu0 0
  %437 = vmatprep.subr.bf16.mxu0 0
  %438 = vmatpush1.bf16.msra.mxu0 0
  %439 = vmatprep.subr.bf16.mxu0 0
  %440 = vmatpush1.bf16.msra.mxu0 0
  %441 = vmatprep.subr.bf16.mxu0 0
  %442 = vmatpush1.bf16.msra.mxu0 0
  %443 = vmatprep.subr.bf16.mxu0 0
  %444 = vmatpush1.bf16.msra.mxu0 0
  %445 = vmatprep.subr.bf16.mxu0 0
  %446 = vmatpush1.bf16.msra.mxu0 0
  %447 = vmatprep.mubr.bf16.mxu0 0
  %448 = vmatmul.mubr.bf16.gmra.mrb[0].mxu0 %v187
  %v449 = vpop.f32.mrb[0].mxu0
  %v450 = vadd.f32 %v368, %v449
  %v451 = vpop.f32.mrb[0].mxu0
  %v452 = vadd.f32 %v372, %v451
  %v453 = vpop.f32.mrb[0].mxu0
  %v454 = vadd.f32 %v368, %v453
  %v455 = vpop.f32.mrb[0].mxu0
  %v456 = vadd.f32 %v372, %v455
  %457 = vdwg.mxu0
  %458 = vst [vmem:[%s6] sm:$0xff] %v450
  %459 = vst.msk [vmem:[%s6 + $0x8] sm:$0xff] %vm185, %v452
  %460 = vst [vmem:[%s6 + $0x10] sm:$0xff] %v454
  %461 = vst.msk [vmem:[%s6 + $0x18] sm:$0xff] %vm185, %v456
  // Predicated region
  $region22: #{gnn_forward.23} parent=0 // pred_check
    _
  $region23: #{gnn_forward.23} parent=0 // pred_check_branch
    %463 = sbr.rel (0) target = $region25
  $region24: #{gnn_forward.23} parent=0 // pred_region
    _
  $region25: #{gnn_forward.23} parent=0 // pred_fallthru
    _
  // Predicated region
  $region26: #{gnn_forward.23} parent=0 // pred_check
    _
  $region27: #{gnn_forward.23} parent=0 // pred_check_branch
    %465 = sbr.rel (0) target = $region29
  $region28: #{gnn_forward.23} parent=0 // pred_region
    _
  $region29: #{gnn_forward.23} parent=0 // pred_fallthru
    _
  // Predicated region
  $region30: #{gnn_forward.23} parent=0 // pred_check
    _
  $region31: #{gnn_forward.23} parent=0 // pred_check_branch
    %467 = sbr.rel (0) target = $region33
  $region32: #{gnn_forward.23} parent=0 // pred_region
    _
  $region33: #{gnn_forward.23} parent=0 // pred_fallthru
    _
  // Predicated region
  $region34: #{gnn_forward.23} parent=0 // pred_check
    _
  $region35: #{gnn_forward.23} parent=0 // pred_check_branch
    %469 = sbr.rel (0) target = $region37
  $region36: #{gnn_forward.23} parent=0 // pred_region
    _
  $region37: #{gnn_forward.23} parent=0 // pred_fallthru
    _

// kernel: gnn_forward.35
$region0: #{gnn_forward.35}
  #allocation0 [shape = 'u32[]', space=smem, size = 0x4, offset = 0x4, fixed_abs, tag = 'smem constant byte address 0x4 - core index']
  #allocation1 [shape = 'u32[144,128]{1,0:T(1,128)}', space=vmem, size = 0x12000, scoped, tag = 'internal scratch']
  %s0 = inlined_call_operand.vmem [shape: bf16[16,128], index: 0, kind: input, shape index: {}]
  %s1 = inlined_call_operand.vmem [shape: bf16[128,256], index: 1, kind: input, shape index: {}]
  %s2 = inlined_call_operand.vmem [shape: f32[1,256], index: 2, kind: input, shape index: {}]
  %s3 = inlined_call_operand.vmem [shape: f32[16,256], index: 3, kind: output, shape index: {}]
  %s4 = sld [smem:[#allocation0]]
  $region22: #{gnn_forward.35} parent=0
    _
  %s6 = ssub.s32 1, %s4
  %s7 = scalar_select 0, %s6, %s4
  // Predicated region
  $region2: #{gnn_forward.35} parent=0 // pred_check
    _
  $region3: #{gnn_forward.35} parent=0 // pred_check_branch
    %9 = sbr.rel (0) target = $region5
  $region4: #{gnn_forward.35} parent=0 // pred_region
    _
  $region5: #{gnn_forward.35} parent=0 // pred_fallthru
    _
  // Predicated region
  $region6: #{gnn_forward.35} parent=0 // pred_check
    _
  $region7: #{gnn_forward.35} parent=0 // pred_check_branch
    %11 = sbr.rel (0) target = $region9
  $region8: #{gnn_forward.35} parent=0 // pred_region
    _
  $region9: #{gnn_forward.35} parent=0 // pred_fallthru
    _
  // Predicated region
  $region10: #{gnn_forward.35} parent=0 // pred_check
    _
  $region11: #{gnn_forward.35} parent=0 // pred_check_branch
    %13 = sbr.rel (0) target = $region13
  $region12: #{gnn_forward.35} parent=0 // pred_region
    _
  $region13: #{gnn_forward.35} parent=0 // pred_fallthru
    _
  %v15 = vld [vmem:[%s0] sm:$0xf]
  %v16 = vld [vmem:[%s0 + $0x4] sm:$0xf]
  %v17 = vld [vmem:[%s1] sm:$0xff]
  %v18 = vld [vmem:[%s1 + $0x8] sm:$0xff]
  %v19 = vld [vmem:[%s1 + $0x10] sm:$0xff]
  %v20 = vld [vmem:[%s1 + $0x18] sm:$0xff]
  %v21 = vld [vmem:[%s1 + $0x20] sm:$0xff]
  %v22 = vld [vmem:[%s1 + $0x28] sm:$0xff]
  %v23 = vld [vmem:[%s1 + $0x30] sm:$0xff]
  %v24 = vld [vmem:[%s1 + $0x38] sm:$0xff]
  %v25 = vld [vmem:[%s1 + $0x40] sm:$0xff]
  %v26 = vld [vmem:[%s1 + $0x48] sm:$0xff]
  %v27 = vld [vmem:[%s1 + $0x50] sm:$0xff]
  %v28 = vld [vmem:[%s1 + $0x58] sm:$0xff]
  %v29 = vld [vmem:[%s1 + $0x60] sm:$0xff]
  %v30 = vld [vmem:[%s1 + $0x68] sm:$0xff]
  %v31 = vld [vmem:[%s1 + $0x70] sm:$0xff]
  %v32 = vld [vmem:[%s1 + $0x78] sm:$0xff]
  %v33 = vld [vmem:[%s2] sm:$0x3]
  %v35 = vlaneseq
  %v36 = vshrl.u32 %v35, 7
  %v37 = vsub.s32 0, %v36
  %v38 = vrot.slane %v33, %v37
  %v39 = vlaneseq
  %v40 = vshrl.u32 %v39, 7
  %v41 = vsub.s32 1, %v40
  %v42 = vrot.slane %v33, %v41
  %v47 = vunpack.c.l.b16 %v15
  %v48 = vunpack.c.l.b16 %v16
  %v49 = vpack.c.b16 %v48, %v47
  %v67 = vunpack.c.l.b16 %v17
  %v68 = vunpack.c.h.b16 %v17
  %v69 = vunpack.c.l.b16 %v18
  %v70 = vunpack.c.h.b16 %v18
  %v71 = vunpack.c.l.b16 %v19
  %v72 = vunpack.c.h.b16 %v19
  %v73 = vunpack.c.l.b16 %v20
  %v74 = vunpack.c.h.b16 %v20
  %v75 = vunpack.c.l.b16 %v21
  %v76 = vunpack.c.h.b16 %v21
  %v77 = vunpack.c.l.b16 %v22
  %v78 = vunpack.c.h.b16 %v22
  %v79 = vunpack.c.l.b16 %v23
  %v80 = vunpack.c.h.b16 %v23
  %v81 = vunpack.c.l.b16 %v24
  %v82 = vunpack.c.h.b16 %v24
  %v83 = vunpack.c.l.b16 %v25
  %v84 = vunpack.c.h.b16 %v25
  %v85 = vunpack.c.l.b16 %v26
  %v86 = vunpack.c.h.b16 %v26
  %v87 = vunpack.c.l.b16 %v27
  %v88 = vunpack.c.h.b16 %v27
  %v89 = vunpack.c.l.b16 %v28
  %v90 = vunpack.c.h.b16 %v28
  %v91 = vunpack.c.l.b16 %v29
  %v92 = vunpack.c.h.b16 %v29
  %v93 = vunpack.c.l.b16 %v30
  %v94 = vunpack.c.h.b16 %v30
  %v95 = vunpack.c.l.b16 %v31
  %v96 = vunpack.c.h.b16 %v31
  %v97 = vunpack.c.l.b16 %v32
  %v98 = vunpack.c.h.b16 %v32
  %v99 = vpack.c.b16 %v69, %v67
  %v100 = vpack.c.b16 %v70, %v68
  %v101 = vpack.c.b16 %v73, %v71
  %v102 = vpack.c.b16 %v74, %v72
  %v103 = vpack.c.b16 %v77, %v75
  %v104 = vpack.c.b16 %v78, %v76
  %v105 = vpack.c.b16 %v81, %v79
  %v106 = vpack.c.b16 %v82, %v80
  %v107 = vpack.c.b16 %v85, %v83
  %v108 = vpack.c.b16 %v86, %v84
  %v109 = vpack.c.b16 %v89, %v87
  %v110 = vpack.c.b16 %v90, %v88
  %v111 = vpack.c.b16 %v93, %v91
  %v112 = vpack.c.b16 %v94, %v92
  %v113 = vpack.c.b16 %v97, %v95
  %v114 = vpack.c.b16 %v98, %v96
  %131 = vmatprep.subr.bf16.mxu0 %v100
  %132 = vmatpush1.bf16.msra.mxu0 %v99
  %133 = vmatprep.subr.bf16.mxu0 %v102
  %134 = vmatpush1.bf16.msra.mxu0 %v101
  %135 = vmatprep.subr.bf16.mxu0 %v104
  %136 = vmatpush1.bf16.msra.mxu0 %v103
  %137 = vmatprep.subr.bf16.mxu0 %v106
  %138 = vmatpush1.bf16.msra.mxu0 %v105
  %139 = vmatprep.subr.bf16.mxu0 %v108
  %140 = vmatpush1.bf16.msra.mxu0 %v107
  %141 = vmatprep.subr.bf16.mxu0 %v110
  %142 = vmatpush1.bf16.msra.mxu0 %v109
  %143 = vmatprep.subr.bf16.mxu0 %v112
  %144 = vmatpush1.bf16.msra.mxu0 %v111
  %145 = vmatprep.subr.bf16.mxu0 %v114
  %146 = vmatpush1.bf16.msra.mxu0 %v113
  %147 = vmatprep.subr.bf16.mxu0 0
  %148 = vmatpush1.bf16.msra.mxu0 0
  %149 = vmatprep.subr.bf16.mxu0 0
  %150 = vmatpush1.bf16.msra.mxu0 0
  %151 = vmatprep.subr.bf16.mxu0 0
  %152 = vmatpush1.bf16.msra.mxu0 0
  %153 = vmatprep.subr.bf16.mxu0 0
  %154 = vmatpush1.bf16.msra.mxu0 0
  %155 = vmatprep.subr.bf16.mxu0 0
  %156 = vmatpush1.bf16.msra.mxu0 0
  %157 = vmatprep.subr.bf16.mxu0 0
  %158 = vmatpush1.bf16.msra.mxu0 0
  %159 = vmatprep.subr.bf16.mxu0 0
  %160 = vmatpush1.bf16.msra.mxu0 0
  %161 = vmatprep.subr.bf16.mxu0 0
  %162 = vmatpush1.bf16.msra.mxu0 0
  %163 = vmatprep.mubr.bf16.mxu0 0
  %164 = vmatmul.mubr.bf16.gmra.mrb[0].mxu0 %v49
  %v165 = vpop.f32.mrb[0].mxu0
  %v166 = vadd.f32 %v38, %v165
  %v167 = vpop.f32.mrb[0].mxu0
  %v168 = vadd.f32 %v42, %v167
  %v169 = vpop.f32.mrb[0].mxu0
  %v170 = vadd.f32 %v38, %v169
  %v171 = vpop.f32.mrb[0].mxu0
  %v172 = vadd.f32 %v42, %v171
  %173 = vdwg.mxu0
  %v174 = vmax.f32 %v166, 0.0
  %v175 = vmax.f32 %v168, 0.0
  %v176 = vmax.f32 %v170, 0.0
  %v177 = vmax.f32 %v172, 0.0
  %178 = vst [vmem:[%s3] sm:$0xff] %v174
  %179 = vst [vmem:[%s3 + $0x8] sm:$0xff] %v175
  %180 = vst [vmem:[%s3 + $0x10] sm:$0xff] %v176
  %181 = vst [vmem:[%s3 + $0x18] sm:$0xff] %v177
  // Predicated region
  $region14: #{gnn_forward.35} parent=0 // pred_check
    _
  $region15: #{gnn_forward.35} parent=0 // pred_check_branch
    %183 = sbr.rel (0) target = $region17
  $region16: #{gnn_forward.35} parent=0 // pred_region
    _
  $region17: #{gnn_forward.35} parent=0 // pred_fallthru
    _
  // Predicated region
  $region18: #{gnn_forward.35} parent=0 // pred_check
    _
  $region19: #{gnn_forward.35} parent=0 // pred_check_branch
    %185 = sbr.rel (0) target = $region21
  $region20: #{gnn_forward.35} parent=0 // pred_region
    _
  $region21: #{gnn_forward.35} parent=0 // pred_fallthru
    _

// kernel: gnn_forward.36
$region0: #{gnn_forward.36}
  #allocation0 [shape = 'u32[]', space=smem, size = 0x4, offset = 0x4, fixed_abs, tag = 'smem constant byte address 0x4 - core index']
  #allocation1 [shape = 'u32[144,128]{1,0:T(1,128)}', space=vmem, size = 0x12000, scoped, tag = 'internal scratch']
  %s0 = inlined_call_operand.vmem [shape: bf16[16,256], index: 0, kind: input, shape index: {}]
  %s1 = inlined_call_operand.vmem [shape: bf16[256,128], index: 1, kind: input, shape index: {}]
  %s2 = inlined_call_operand.vmem [shape: f32[1,128], index: 2, kind: input, shape index: {}]
  %s3 = inlined_call_operand.vmem [shape: f32[16,128], index: 3, kind: output, shape index: {}]
  %s4 = sld [smem:[#allocation0]]
  $region22: #{gnn_forward.36} parent=0
    _
  %s6 = ssub.s32 1, %s4
  %s7 = scalar_select 0, %s6, %s4
  // Predicated region
  $region2: #{gnn_forward.36} parent=0 // pred_check
    _
  $region3: #{gnn_forward.36} parent=0 // pred_check_branch
    %9 = sbr.rel (0) target = $region5
  $region4: #{gnn_forward.36} parent=0 // pred_region
    _
  $region5: #{gnn_forward.36} parent=0 // pred_fallthru
    _
  // Predicated region
  $region6: #{gnn_forward.36} parent=0 // pred_check
    _
  $region7: #{gnn_forward.36} parent=0 // pred_check_branch
    %11 = sbr.rel (0) target = $region9
  $region8: #{gnn_forward.36} parent=0 // pred_region
    _
  $region9: #{gnn_forward.36} parent=0 // pred_fallthru
    _
  // Predicated region
  $region10: #{gnn_forward.36} parent=0 // pred_check
    _
  $region11: #{gnn_forward.36} parent=0 // pred_check_branch
    %13 = sbr.rel (0) target = $region13
  $region12: #{gnn_forward.36} parent=0 // pred_region
    _
  $region13: #{gnn_forward.36} parent=0 // pred_fallthru
    _
  %v15 = vld [vmem:[%s0] sm:$0xff]
  %v16 = vld [vmem:[%s0 + $0x8] sm:$0xff]
  %v17 = vld [vmem:[%s1] sm:$0xf]
  %v18 = vld [vmem:[%s1 + $0x4] sm:$0xf]
  %v19 = vld [vmem:[%s1 + $0x8] sm:$0xf]
  %v20 = vld [vmem:[%s1 + $0xc] sm:$0xf]
  %v21 = vld [vmem:[%s1 + $0x10] sm:$0xf]
  %v22 = vld [vmem:[%s1 + $0x14] sm:$0xf]
  %v23 = vld [vmem:[%s1 + $0x18] sm:$0xf]
  %v24 = vld [vmem:[%s1 + $0x1c] sm:$0xf]
  %v25 = vld [vmem:[%s1 + $0x20] sm:$0xf]
  %v26 = vld [vmem:[%s1 + $0x24] sm:$0xf]
  %v27 = vld [vmem:[%s1 + $0x28] sm:$0xf]
  %v28 = vld [vmem:[%s1 + $0x2c] sm:$0xf]
  %v29 = vld [vmem:[%s1 + $0x30] sm:$0xf]
  %v30 = vld [vmem:[%s1 + $0x34] sm:$0xf]
  %v31 = vld [vmem:[%s1 + $0x38] sm:$0xf]
  %v32 = vld [vmem:[%s1 + $0x3c] sm:$0xf]
  %v33 = vld [vmem:[%s1 + $0x40] sm:$0xf]
  %v34 = vld [vmem:[%s1 + $0x44] sm:$0xf]
  %v35 = vld [vmem:[%s1 + $0x48] sm:$0xf]
  %v36 = vld [vmem:[%s1 + $0x4c] sm:$0xf]
  %v37 = vld [vmem:[%s1 + $0x50] sm:$0xf]
  %v38 = vld [vmem:[%s1 + $0x54] sm:$0xf]
  %v39 = vld [vmem:[%s1 + $0x58] sm:$0xf]
  %v40 = vld [vmem:[%s1 + $0x5c] sm:$0xf]
  %v41 = vld [vmem:[%s1 + $0x60] sm:$0xf]
  %v42 = vld [vmem:[%s1 + $0x64] sm:$0xf]
  %v43 = vld [vmem:[%s1 + $0x68] sm:$0xf]
  %v44 = vld [vmem:[%s1 + $0x6c] sm:$0xf]
  %v45 = vld [vmem:[%s1 + $0x70] sm:$0xf]
  %v46 = vld [vmem:[%s1 + $0x74] sm:$0xf]
  %v47 = vld [vmem:[%s1 + $0x78] sm:$0xf]
  %v48 = vld [vmem:[%s1 + $0x7c] sm:$0xf]
  %v49 = vld [vmem:[%s2] sm:$0x1]
  %v51 = vlaneseq
  %v52 = vshrl.u32 %v51, 7
  %v53 = vsub.s32 0, %v52
  %v54 = vrot.slane %v49, %v53
  %v58 = vunpack.c.l.b16 %v15
  %v59 = vunpack.c.h.b16 %v15
  %v60 = vunpack.c.l.b16 %v16
  %v61 = vunpack.c.h.b16 %v16
  %v62 = vpack.c.b16 %v60, %v58
  %v63 = vpack.c.b16 %v61, %v59
  %v98 = vunpack.c.l.b16 %v17
  %v99 = vunpack.c.l.b16 %v18
  %v100 = vunpack.c.l.b16 %v19
  %v101 = vunpack.c.l.b16 %v20
  %v102 = vunpack.c.l.b16 %v21
  %v103 = vunpack.c.l.b16 %v22
  %v104 = vunpack.c.l.b16 %v23
  %v105 = vunpack.c.l.b16 %v24
  %v106 = vunpack.c.l.b16 %v25
  %v107 = vunpack.c.l.b16 %v26
  %v108 = vunpack.c.l.b16 %v27
  %v109 = vunpack.c.l.b16 %v28
  %v110 = vunpack.c.l.b16 %v29
  %v111 = vunpack.c.l.b16 %v30
  %v112 = vunpack.c.l.b16 %v31
  %v113 = vunpack.c.l.b16 %v32
  %v114 = vunpack.c.l.b16 %v33
  %v115 = vunpack.c.l.b16 %v34
  %v116 = vunpack.c.l.b16 %v35
  %v117 = vunpack.c.l.b16 %v36
  %v118 = vunpack.c.l.b16 %v37
  %v119 = vunpack.c.l.b16 %v38
  %v120 = vunpack.c.l.b16 %v39
  %v121 = vunpack.c.l.b16 %v40
  %v122 = vunpack.c.l.b16 %v41
  %v123 = vunpack.c.l.b16 %v42
  %v124 = vunpack.c.l.b16 %v43
  %v125 = vunpack.c.l.b16 %v44
  %v126 = vunpack.c.l.b16 %v45
  %v127 = vunpack.c.l.b16 %v46
  %v128 = vunpack.c.l.b16 %v47
  %v129 = vunpack.c.l.b16 %v48
  %v130 = vpack.c.b16 %v99, %v98
  %v131 = vpack.c.b16 %v101, %v100
  %v132 = vpack.c.b16 %v103, %v102
  %v133 = vpack.c.b16 %v105, %v104
  %v134 = vpack.c.b16 %v107, %v106
  %v135 = vpack.c.b16 %v109, %v108
  %v136 = vpack.c.b16 %v111, %v110
  %v137 = vpack.c.b16 %v113, %v112
  %v138 = vpack.c.b16 %v115, %v114
  %v139 = vpack.c.b16 %v117, %v116
  %v140 = vpack.c.b16 %v119, %v118
  %v141 = vpack.c.b16 %v121, %v120
  %v142 = vpack.c.b16 %v123, %v122
  %v143 = vpack.c.b16 %v125, %v124
  %v144 = vpack.c.b16 %v127, %v126
  %v145 = vpack.c.b16 %v129, %v128
  %162 = vmatprep.subr.bf16.mxu0 0
  %163 = vmatpush1.bf16.msra.mxu0 %v130
  %164 = vmatprep.subr.bf16.mxu0 0
  %165 = vmatpush1.bf16.msra.mxu0 %v131
  %166 = vmatprep.subr.bf16.mxu0 0
  %167 = vmatpush1.bf16.msra.mxu0 %v132
  %168 = vmatprep.subr.bf16.mxu0 0
  %169 = vmatpush1.bf16.msra.mxu0 %v133
  %170 = vmatprep.subr.bf16.mxu0 0
  %171 = vmatpush1.bf16.msra.mxu0 %v134
  %172 = vmatprep.subr.bf16.mxu0 0
  %173 = vmatpush1.bf16.msra.mxu0 %v135
  %174 = vmatprep.subr.bf16.mxu0 0
  %175 = vmatpush1.bf16.msra.mxu0 %v136
  %176 = vmatprep.subr.bf16.mxu0 0
  %177 = vmatpush1.bf16.msra.mxu0 %v137
  %178 = vmatprep.subr.bf16.mxu0 0
  %179 = vmatpush1.bf16.msra.mxu0 %v138
  %180 = vmatprep.subr.bf16.mxu0 0
  %181 = vmatpush1.bf16.msra.mxu0 %v139
  %182 = vmatprep.subr.bf16.mxu0 0
  %183 = vmatpush1.bf16.msra.mxu0 %v140
  %184 = vmatprep.subr.bf16.mxu0 0
  %185 = vmatpush1.bf16.msra.mxu0 %v141
  %186 = vmatprep.subr.bf16.mxu0 0
  %187 = vmatpush1.bf16.msra.mxu0 %v142
  %188 = vmatprep.subr.bf16.mxu0 0
  %189 = vmatpush1.bf16.msra.mxu0 %v143
  %190 = vmatprep.subr.bf16.mxu0 0
  %191 = vmatpush1.bf16.msra.mxu0 %v144
  %192 = vmatprep.subr.bf16.mxu0 0
  %193 = vmatpush1.bf16.msra.mxu0 %v145
  %194 = vmatprep.mubr.bf16.mxu0 %v63
  %195 = vmatmul.mubr.bf16.gmra.mrb[0].mxu0 %v62
  %v196 = vpop.f32.mrb[0].mxu0
  %v197 = vadd.f32 %v54, %v196
  %v198 = vpop.f32.mrb[0].mxu0
  %v199 = vpop.f32.mrb[0].mxu0
  %v200 = vadd.f32 %v54, %v199
  %v201 = vpop.f32.mrb[0].mxu0
  %202 = vdwg.mxu0
  %v203 = vmax.f32 %v197, 0.0
  %v204 = vmax.f32 %v200, 0.0
  %205 = vst [vmem:[%s3] sm:$0xff] %v203
  %206 = vst [vmem:[%s3 + $0x8] sm:$0xff] %v204
  // Predicated region
  $region14: #{gnn_forward.36} parent=0 // pred_check
    _
  $region15: #{gnn_forward.36} parent=0 // pred_check_branch
    %208 = sbr.rel (0) target = $region17
  $region16: #{gnn_forward.36} parent=0 // pred_region
    _
  $region17: #{gnn_forward.36} parent=0 // pred_fallthru
    _
  // Predicated region
  $region18: #{gnn_forward.36} parent=0 // pred_check
    _
  $region19: #{gnn_forward.36} parent=0 // pred_check_branch
    %210 = sbr.rel (0) target = $region21
  $region20: #{gnn_forward.36} parent=0 // pred_region
    _
  $region21: #{gnn_forward.36} parent=0 // pred_fallthru
    _

// kernel: gnn_forward.37
$region0: #{gnn_forward.37}
  #allocation0 [shape = 'u32[]', space=smem, size = 0x4, offset = 0x4, fixed_abs, tag = 'smem constant byte address 0x4 - core index']
  #allocation1 [shape = 'u32[144,128]{1,0:T(1,128)}', space=vmem, size = 0x12000, scoped, tag = 'internal scratch']
  #allocation2 [shape = 'f32[1,1]{1,0:T(1,128)S(1)}', space=vmem, size = 0x200, scoped, tag = 'scoped memory for gnn_forward.37']
  %s0 = inlined_call_operand.vmem [shape: bf16[16,128], index: 0, kind: input, shape index: {}]
  %s1 = inlined_call_operand.vmem [shape: bf16[128,1], index: 1, kind: input, shape index: {}]
  %s2 = inlined_call_operand.<no memory space> [shape: f32[1,1], index: 2, kind: input, shape index: {}]
  %s3 = inlined_call_operand.vmem [shape: f32[16,1], index: 3, kind: output, shape index: {}]
  %s4 = sld [smem:[#allocation0]]
  $region22: #{gnn_forward.37} parent=0
    _
  %s6 = ssub.s32 1, %s4
  %s7 = scalar_select 0, %s6, %s4
  %v8 = vstv %s2
  %9 = vst [vmem:[#allocation2] sm:$0x1] %v8
  // Predicated region
  $region2: #{gnn_forward.37} parent=0 // pred_check
    _
  $region3: #{gnn_forward.37} parent=0 // pred_check_branch
    %11 = sbr.rel (0) target = $region5
  $region4: #{gnn_forward.37} parent=0 // pred_region
    _
  $region5: #{gnn_forward.37} parent=0 // pred_fallthru
    _
  // Predicated region
  $region6: #{gnn_forward.37} parent=0 // pred_check
    _
  $region7: #{gnn_forward.37} parent=0 // pred_check_branch
    %13 = sbr.rel (0) target = $region9
  $region8: #{gnn_forward.37} parent=0 // pred_region
    _
  $region9: #{gnn_forward.37} parent=0 // pred_fallthru
    _
  // Predicated region
  $region10: #{gnn_forward.37} parent=0 // pred_check
    _
  $region11: #{gnn_forward.37} parent=0 // pred_check_branch
    %15 = sbr.rel (0) target = $region13
  $region12: #{gnn_forward.37} parent=0 // pred_region
    _
  $region13: #{gnn_forward.37} parent=0 // pred_fallthru
    _
  %v17 = vld [vmem:[%s0] sm:$0xf]
  %v18 = vld [vmem:[%s0 + $0x4] sm:$0xf]
  %v19 = vld [vmem:[%s1] sm:$0xf]
  %v20 = vld [vmem:[%s1 + $0x4] sm:$0xf]
  %v21 = vld [vmem:[%s1 + $0x8] sm:$0xf]
  %v22 = vld [vmem:[%s1 + $0xc] sm:$0xf]
  %v23 = vld [vmem:[%s1 + $0x10] sm:$0xf]
  %v24 = vld [vmem:[%s1 + $0x14] sm:$0xf]
  %v25 = vld [vmem:[%s1 + $0x18] sm:$0xf]
  %v26 = vld [vmem:[%s1 + $0x1c] sm:$0xf]
  %v27 = vld [vmem:[%s1 + $0x20] sm:$0xf]
  %v28 = vld [vmem:[%s1 + $0x24] sm:$0xf]
  %v29 = vld [vmem:[%s1 + $0x28] sm:$0xf]
  %v30 = vld [vmem:[%s1 + $0x2c] sm:$0xf]
  %v31 = vld [vmem:[%s1 + $0x30] sm:$0xf]
  %v32 = vld [vmem:[%s1 + $0x34] sm:$0xf]
  %v33 = vld [vmem:[%s1 + $0x38] sm:$0xf]
  %v34 = vld [vmem:[%s1 + $0x3c] sm:$0xf]
  %v35 = vld [vmem:[#allocation2] sm:$0x1]
  %v37 = vlaneseq
  %v38 = vshrl.u32 %v37, 7
  %v39 = vsub.s32 0, %v38
  %v40 = vrot.slane %v35, %v39
  %v44 = vunpack.c.l.b16 %v17
  %v45 = vunpack.c.l.b16 %v18
  %v46 = vpack.c.b16 %v45, %v44
  %v64 = vunpack.c.l.b16 %v19
  %v65 = vunpack.c.l.b16 %v20
  %v66 = vunpack.c.l.b16 %v21
  %v67 = vunpack.c.l.b16 %v22
  %v68 = vunpack.c.l.b16 %v23
  %v69 = vunpack.c.l.b16 %v24
  %v70 = vunpack.c.l.b16 %v25
  %v71 = vunpack.c.l.b16 %v26
  %v72 = vunpack.c.l.b16 %v27
  %v73 = vunpack.c.l.b16 %v28
  %v74 = vunpack.c.l.b16 %v29
  %v75 = vunpack.c.l.b16 %v30
  %v76 = vunpack.c.l.b16 %v31
  %v77 = vunpack.c.l.b16 %v32
  %v78 = vunpack.c.l.b16 %v33
  %v79 = vunpack.c.l.b16 %v34
  %v80 = vpack.c.b16 %v65, %v64
  %v81 = vpack.c.b16 %v67, %v66
  %v82 = vpack.c.b16 %v69, %v68
  %v83 = vpack.c.b16 %v71, %v70
  %v84 = vpack.c.b16 %v73, %v72
  %v85 = vpack.c.b16 %v75, %v74
  %v86 = vpack.c.b16 %v77, %v76
  %v87 = vpack.c.b16 %v79, %v78
  %96 = vmatprep.subr.bf16.mxu0 0
  %97 = vmatpush1.bf16.msra.mxu0 %v80
  %98 = vmatprep.subr.bf16.mxu0 0
  %99 = vmatpush1.bf16.msra.mxu0 %v81
  %100 = vmatprep.subr.bf16.mxu0 0
  %101 = vmatpush1.bf16.msra.mxu0 %v82
  %102 = vmatprep.subr.bf16.mxu0 0
  %103 = vmatpush1.bf16.msra.mxu0 %v83
  %104 = vmatprep.subr.bf16.mxu0 0
  %105 = vmatpush1.bf16.msra.mxu0 %v84
  %106 = vmatprep.subr.bf16.mxu0 0
  %107 = vmatpush1.bf16.msra.mxu0 %v85
  %108 = vmatprep.subr.bf16.mxu0 0
  %109 = vmatpush1.bf16.msra.mxu0 %v86
  %110 = vmatprep.subr.bf16.mxu0 0
  %111 = vmatpush1.bf16.msra.mxu0 %v87
  %112 = vmatprep.subr.bf16.mxu0 0
  %113 = vmatpush1.bf16.msra.mxu0 0
  %114 = vmatprep.subr.bf16.mxu0 0
  %115 = vmatpush1.bf16.msra.mxu0 0
  %116 = vmatprep.subr.bf16.mxu0 0
  %117 = vmatpush1.bf16.msra.mxu0 0
  %118 = vmatprep.subr.bf16.mxu0 0
  %119 = vmatpush1.bf16.msra.mxu0 0
  %120 = vmatprep.subr.bf16.mxu0 0
  %121 = vmatpush1.bf16.msra.mxu0 0
  %122 = vmatprep.subr.bf16.mxu0 0
  %123 = vmatpush1.bf16.msra.mxu0 0
  %124 = vmatprep.subr.bf16.mxu0 0
  %125 = vmatpush1.bf16.msra.mxu0 0
  %126 = vmatprep.subr.bf16.mxu0 0
  %127 = vmatpush1.bf16.msra.mxu0 0
  %128 = vmatprep.mubr.bf16.mxu0 0
  %129 = vmatmul.mubr.bf16.gmra.mrb[0].mxu0 %v46
  %v130 = vpop.f32.mrb[0].mxu0
  %v131 = vadd.f32 %v40, %v130
  %v132 = vpop.f32.mrb[0].mxu0
  %v133 = vpop.f32.mrb[0].mxu0
  %v134 = vadd.f32 %v40, %v133
  %v135 = vpop.f32.mrb[0].mxu0
  %136 = vdwg.mxu0
  %vm137 = vcmask 7168
  %138 = vst.msk [vmem:[%s3] sm:$0xff] %vm137, %v131
  %139 = vst.msk [vmem:[%s3 + $0x8] sm:$0xff] %vm137, %v134
  // Predicated region
  $region14: #{gnn_forward.37} parent=0 // pred_check
    _
  $region15: #{gnn_forward.37} parent=0 // pred_check_branch
    %141 = sbr.rel (0) target = $region17
  $region16: #{gnn_forward.37} parent=0 // pred_region
    _
  $region17: #{gnn_forward.37} parent=0 // pred_fallthru
    _
  // Predicated region
  $region18: #{gnn_forward.37} parent=0 // pred_check
    _
  $region19: #{gnn_forward.37} parent=0 // pred_check_branch
    %143 = sbr.rel (0) target = $region21
  $region20: #{gnn_forward.37} parent=0 // pred_region
    _
  $region21: #{gnn_forward.37} parent=0 // pred_fallthru
    _

</llo_original>
